<compile_context>
chip_gen: v6e
topology: v6e:2x2x1
jax: 0.10.0
libtpu: 0.0.40
codegen_flags: <defaults>
</compile_context>

<pallas_src>
import jax
import jax.numpy as jnp
from jax.experimental import pallas as pl
from jax.experimental.pallas import tpu as pltpu

ALPHA = 0.01      # self.alpha in the PyTorch module
EPS = 1e-12       # cosine-similarity denominator guard
LANE = 128        # TPU lane width


def _round_up(x, m):
    return ((x + m - 1) // m) * m


def _pad2d(x, rows, cols):
    return jnp.pad(x, ((0, rows - x.shape[0]), (0, cols - x.shape[1])))


def _tpu_kind():
    try:
        return jax.devices()[0].device_kind.lower()
    except Exception:
        return ""


def _make_kernel(fuse_stem, n_ch, hw, t_pad):
    def kernel(videos_ref, audios_ref, w_vid_ref, b_cov_ref,
               w_stem_ref, b_stem_ref, w_aud_ref, b_aud_ref,
               w_cls_ref, b_cls_ref, out_ref):
        # ---- video branch: one bf16 MXU dot yields [videos_sum | cov_raw] ----
        vid_both = jnp.dot(videos_ref[...], w_vid_ref[...],
                           preferred_element_type=jnp.float32)        # (tb, 2*t_pad)
        videos_sum = vid_both[:, :t_pad]
        cov_raw = vid_both[:, t_pad:]
        # cov_fc = Linear + ReLU, plus alpha residual (padded lanes stay 0).
        vf = jnp.maximum(cov_raw + b_cov_ref[...], 0.0) + ALPHA * videos_sum

        # ---- audio branch ----------------------------------------------------
        # TODO(synk): ResNet18 feature extractor stubbed: spatial mean-pool +
        # (C->512) linear + ReLU producing the (tb, 512) feature fed to audio_fc.
        if fuse_stem:
            # pool + stem fused into one bf16 MXU matmul (weight pre-divided by HW)
            feat = jnp.dot(audios_ref[...], w_stem_ref[...],
                           preferred_element_type=jnp.float32) + b_stem_ref[...]
        else:
            tb = audios_ref.shape[0]
            n_feat = w_stem_ref.shape[1]
            feat = jnp.zeros((tb, n_feat), jnp.float32) + b_stem_ref[...]
            inv_hw = jnp.float32(1.0 / hw)
            for c in range(n_ch):   # K=C(=3): a few VPU FMAs, kept off the MXU (v5e)
                pooled_c = jnp.sum(audios_ref[:, c * hw:(c + 1) * hw],
                                   axis=1, keepdims=True,
                                   dtype=jnp.float32) * inv_hw
                feat = feat + pooled_c * w_stem_ref[c:c + 1, :]
        feat = jnp.maximum(feat, 0.0)                                  # (tb, 512)

        af = jnp.dot(feat.astype(jnp.bfloat16), w_aud_ref[...],
                     preferred_element_type=jnp.float32) + b_aud_ref[...]  # (tb, t_pad)

        # ---- per-sample cosine similarity (EUP rsqrt, eps-guarded) -----------
        vv = jnp.sum(vf * vf, axis=1, keepdims=True)
        aa = jnp.sum(af * af, axis=1, keepdims=True)
        va = jnp.sum(vf * af, axis=1, keepdims=True)
        cos = va * jax.lax.rsqrt(vv * aa + EPS)                        # (tb, 1)

        # ---- classification head: one K=2*t_pad bf16 dot on lane-aligned concat
        all_feat = jnp.concatenate([vf.astype(jnp.bfloat16),
                                    af.astype(jnp.bfloat16)], axis=1)  # (tb, 2*t_pad)
        logits = jnp.dot(all_feat, w_cls_ref[...],
                         preferred_element_type=jnp.float32) + b_cls_ref[...]

        # mode == 'train': logits + cosine similarity (broadcast over padded classes;
        # the wrapper slices back to num_class).
        out_ref[...] = logits + cos
    return kernel


def _choose_batch_tile(B, per_row_bytes, budget_bytes, min_blocks):
    tb = max(16, int(budget_bytes // max(per_row_bytes, 1)))
    if min_blocks > 1:
        # keep >= min_blocks grid steps so the pipeline / megacore has work to split
        tb = min(tb, _round_up(pl.cdiv(B, min_blocks), 16))
    if tb >= B:
        return B
    return max(16, (tb // 16) * 16)   # bf16 sublane packing: 16-row alignment


def ffdv_cov_forward(videos, audios, params):
    """videos: (B,T,D) f32; audios: (B,C,H,W) f32 NCHW. Returns (B, num_class) f32."""
    B, T, D = videos.shape
    _, C, H, W = audios.shape
    num_class = params["b_cls"].shape[-1]
    n_feat = params["w_stem"].shape[1]

    TD, HW, CHW = T * D, H * W, C * H * W
    T_pad = _round_up(T, LANE)
    NC_pad = _round_up(num_class, LANE)

    kind = _tpu_kind()
    is_v5 = "v5" in kind
    is_v7 = "v7" in kind

    # ---- glue: lane-dense bf16 input slabs (bf16 traffic is a deliberate tradeoff)
    videos2d = videos.reshape(B, TD).astype(jnp.bfloat16)
    audios2d = audios.reshape(B, CHW).astype(jnp.bfloat16)

    # ---- weight prep: pad to 128-lane dense; matmul weights in bf16 ------------
    # torch.sum(videos, dim=2) as a block-diagonal ones matrix, with cov_fc folded in.
    sum_mat = jnp.repeat(jnp.eye(T, dtype=jnp.float32), D, axis=0)      # (TD, T)
    sum_mat = _pad2d(sum_mat, TD, T_pad)
    w_cov_p = _pad2d(params["w_cov"], T_pad, T_pad)
    w_vid = jnp.concatenate([sum_mat, sum_mat @ w_cov_p], axis=1).astype(jnp.bfloat16)
    b_cov = _pad2d(params["b_cov"], 1, T_pad)

    # fuse pool+stem into one bf16 matmul on v6e/v7x (roofline-safe); keep it off the
    # MXU on v5e or if the expanded weight would be unreasonably large.
    fuse_stem = (not is_v5) and (CHW * n_feat * 2 <= (16 << 20))
    if fuse_stem:
        w_stem = (jnp.repeat(params["w_stem"], HW, axis=0) / HW).astype(jnp.bfloat16)
    else:
        w_stem = params["w_stem"]                                       # (C, n_feat) f32
    b_stem = params["b_stem"]                                           # (1, n_feat)

    w_aud = _pad2d(params["w_aud"], n_feat, T_pad).astype(jnp.bfloat16)
    b_aud = _pad2d(params["b_aud"], 1, T_pad)

    # stacked cls weight for the single K=2*T_pad dot on concat([vf, af])
    w_cls = jnp.zeros((2 * T_pad, NC_pad), jnp.float32)
    w_cls = w_cls.at[:T, :num_class].set(params["w_cls"][:T])
    w_cls = w_cls.at[T_pad:T_pad + T, :num_class].set(params["w_cls"][T:])
    w_cls = w_cls.astype(jnp.bfloat16)
    b_cls = _pad2d(params["b_cls"], 1, NC_pad)

    # ---- generation-aware VMEM budget & batch tiling ---------------------------
    if is_v7:
        tile_budget, vmem_cap, min_blocks = 20 << 20, 48 << 20, 4   # 64 MiB physical
    else:
        tile_budget, vmem_cap, min_blocks = 48 << 20, 96 << 20, 2   # 128 MiB physical

    # per-row bytes: double-buffered bf16 inputs + f32 output + in-kernel intermediates
    per_row = (2 * TD * 2 + 2 * CHW * 2 + 2 * NC_pad * 4
               + 4 * (2 * T_pad        # vid_both
                      + 2 * T_pad      # vf, af
                      + n_feat         # feat (f32)
                      + 2 * T_pad      # concat (f32 before cast)
                      + NC_pad)        # logits
               + 2 * (n_feat + 2 * T_pad))   # bf16 casts of feat / concat
    TB = _choose_batch_tile(B, per_row, tile_budget, min_blocks)
    num_blocks = pl.cdiv(B, TB)
    Bp = num_blocks * TB
    if Bp > B:   # pad the ragged tail so every block is full (and zero, not garbage)
        videos2d = jnp.pad(videos2d, ((0, Bp - B), (0, 0)))
        audios2d = jnp.pad(audios2d, ((0, Bp - B), (0, 0)))

    weight_bytes = (w_vid.size * 2 + w_stem.size * w_stem.dtype.itemsize
                    + w_aud.size * 2 + w_cls.size * 2
                    + 4 * (b_cov.size + b_stem.size + b_aud.size + b_cls.size))
    vmem_limit = int(min(max(TB * per_row + 2 * weight_bytes + (4 << 20), 32 << 20),
                         vmem_cap))

    const2 = lambda b: (0, 0)
    in_specs = [
        pl.BlockSpec((TB, TD), lambda b: (b, 0)),       # videos (bf16)
        pl.BlockSpec((TB, CHW), lambda b: (b, 0)),      # audios (bf16)
        pl.BlockSpec((TD, 2 * T_pad), const2),          # fused [sum | sum@w_cov]
        pl.BlockSpec((1, T_pad), const2),               # b_cov
        pl.BlockSpec(w_stem.shape, const2),             # stem weight (fused or (C,512))
        pl.BlockSpec((1, n_feat), const2),              # b_stem
        pl.BlockSpec((n_feat, T_pad), const2),          # w_aud
        pl.BlockSpec((1, T_pad), const2),               # b_aud
        pl.BlockSpec((2 * T_pad, NC_pad), const2),      # stacked w_cls
        pl.BlockSpec((1, NC_pad), const2),              # b_cls
    ]

    out_padded = pl.pallas_call(
        _make_kernel(fuse_stem, C, HW, T_pad),
        out_shape=jax.ShapeDtypeStruct((Bp, NC_pad), jnp.float32),
        grid=(num_blocks,),
        in_specs=in_specs,
        out_specs=pl.BlockSpec((TB, NC_pad), lambda b: (b, 0)),
        compiler_params=pltpu.CompilerParams(
            dimension_semantics=("parallel",),
            vmem_limit_bytes=vmem_limit),
    )(videos2d, audios2d, w_vid, b_cov, w_stem, b_stem, w_aud, b_aud, w_cls, b_cls)

    return out_padded[:B, :num_class]


def init_params(key, temporal, num_class, stem_in=3, audio_feat_dim=512):
    """Deterministic init. Weights stored pre-transposed as (in, out); biases (1, out)."""
    ks = jax.random.split(key, 8)

    def lin(kw, kb, fan_in, fan_out):
        bound = 1.0 / jnp.sqrt(float(fan_in))
        w = jax.random.uniform(kw, (fan_in, fan_out), jnp.float32, -bound, bound)
        b = jax.random.uniform(kb, (1, fan_out), jnp.float32, -bound, bound)
        return w, b

    w_stem, b_stem = lin(ks[0], ks[1], stem_in, audio_feat_dim)   # backbone stand-in
    w_cov, b_cov = lin(ks[2], ks[3], temporal, temporal)          # cov_fc
    w_aud, b_aud = lin(ks[4], ks[5], audio_feat_dim, temporal)    # audio_fc
    w_cls, b_cls = lin(ks[6], ks[7], 2 * temporal, num_class)     # cls_head

    return {"w_stem": w_stem, "b_stem": b_stem,
            "w_cov": w_cov, "b_cov": b_cov,
            "w_aud": w_aud, "b_aud": b_aud,
            "w_cls": w_cls, "b_cls": b_cls}


def ffdv_cov_reference(videos, audios, params):
    """Pure-JAX f32 reference (train mode) on the same bf16-quantized inputs."""
    B = videos.shape[0]
    v = videos.astype(jnp.bfloat16).astype(jnp.float32)
    a = audios.astype(jnp.bfloat16).astype(jnp.float32)
    videos_sum = jnp.sum(v, axis=2)
    vf = jax.nn.relu(videos_sum @ params["w_cov"] + params["b_cov"]) + ALPHA * videos_sum
    pooled = jnp.mean(a.reshape(B, a.shape[1], -1), axis=2)
    feat = jax.nn.relu(pooled @ params["w_stem"] + params["b_stem"])
    af = feat @ params["w_aud"] + params["b_aud"]
    vv = jnp.sum(vf * vf, axis=1, keepdims=True)
    aa = jnp.sum(af * af, axis=1, keepdims=True)
    va = jnp.sum(vf * af, axis=1, keepdims=True)
    cos = va * jax.lax.rsqrt(vv * aa + EPS)
    logits = jnp.concatenate([vf, af], axis=1) @ params["w_cls"] + params["b_cls"]
    return logits + cos


if __name__ == "__main__":
    B, T, D = 2, 8, 16          # batch, temporal, per-frame video feature dim
    C, H, W = 3, 16, 16         # audio "image" fed to the (stubbed) backbone
    NUM_CLASS = 2

    key = jax.random.PRNGKey(0)
    k_vid, k_aud, k_par = jax.random.split(key, 3)

    videos = jax.random.normal(k_vid, (B, T, D), jnp.float32)
    audios = jax.random.normal(k_aud, (B, C, H, W), jnp.float32)
    params = init_params(k_par, T, NUM_CLASS, stem_in=C, audio_feat_dim=512)

    out = jax.block_until_ready(ffdv_cov_forward(videos, audios, params))
    ref = ffdv_cov_reference(videos, audios, params)

    # bf16 weight/activation traffic + MXU accumulation order -> modest tolerance.
    if not bool(jnp.allclose(out, ref, atol=1e-1, rtol=1e-1)):
        diff = jnp.max(jnp.abs(out - ref))
        raise AssertionError(f"Pallas output mismatch (max|diff|={diff}):\n{out}\nvs\n{ref}")

    print("KERNEL_OK")
</pallas_src>

<mosaic_0001>
module attributes {stable_mosaic.version = 11 : i64} {
  func.func @kernel(%arg0: i32, %arg1: memref<2x128xbf16, #tpu.memory_space<vmem>>, %arg2: memref<2x768xbf16, #tpu.memory_space<vmem>>, %arg3: memref<128x256xbf16, #tpu.memory_space<vmem>>, %arg4: memref<1x128xf32, #tpu.memory_space<vmem>>, %arg5: memref<768x512xbf16, #tpu.memory_space<vmem>>, %arg6: memref<1x512xf32, #tpu.memory_space<vmem>>, %arg7: memref<512x128xbf16, #tpu.memory_space<vmem>>, %arg8: memref<1x128xf32, #tpu.memory_space<vmem>>, %arg9: memref<256x128xbf16, #tpu.memory_space<vmem>>, %arg10: memref<1x128xf32, #tpu.memory_space<vmem>>, %arg11: memref<2x128xf32, #tpu.memory_space<vmem>>) attributes {dimension_semantics = [#tpu.dimension_semantics<parallel>], iteration_bounds = array<i64: 1>, scalar_prefetch = 0 : i64, scratch_operands = 0 : i64, tpu.core_type = #tpu.core_type<tc>, window_params = [{transform_indices = @transform_0, window_bounds = array<i64: 2, 128>}, {transform_indices = @transform_1, window_bounds = array<i64: 2, 768>}, {pipeline_mode = #tpu.pipeline_mode<synchronous>, transform_indices = @transform_2, window_bounds = array<i64: 128, 256>}, {pipeline_mode = #tpu.pipeline_mode<synchronous>, transform_indices = @transform_3, window_bounds = array<i64: 1, 128>}, {pipeline_mode = #tpu.pipeline_mode<synchronous>, transform_indices = @transform_4, window_bounds = array<i64: 768, 512>}, {pipeline_mode = #tpu.pipeline_mode<synchronous>, transform_indices = @transform_5, window_bounds = array<i64: 1, 512>}, {pipeline_mode = #tpu.pipeline_mode<synchronous>, transform_indices = @transform_6, window_bounds = array<i64: 512, 128>}, {pipeline_mode = #tpu.pipeline_mode<synchronous>, transform_indices = @transform_7, window_bounds = array<i64: 1, 128>}, {pipeline_mode = #tpu.pipeline_mode<synchronous>, transform_indices = @transform_8, window_bounds = array<i64: 256, 128>}, {pipeline_mode = #tpu.pipeline_mode<synchronous>, transform_indices = @transform_9, window_bounds = array<i64: 1, 128>}, {transform_indices = @transform_10, window_bounds = array<i64: 2, 128>}]} {
    %c0 = arith.constant 0 : index
    %c0_0 = arith.constant 0 : index
    %0 = vector.load %arg1[%c0, %c0_0] : memref<2x128xbf16, #tpu.memory_space<vmem>>, vector<2x128xbf16>
    %c0_1 = arith.constant 0 : index
    %c0_2 = arith.constant 0 : index
    %1 = vector.load %arg3[%c0_1, %c0_2] : memref<128x256xbf16, #tpu.memory_space<vmem>>, vector<128x256xbf16>
    %cst = arith.constant dense<0.000000e+00> : vector<2x256xf32>
    %2 = tpu.matmul %0, %1, %cst {dimension_numbers = #tpu.dot_dimension_numbers<[1], [0], [0], [1], [0, 0, 1, 1], [], []>} : vector<2x128xbf16>, vector<128x256xbf16>, vector<2x256xf32> -> vector<2x256xf32>
    %3 = vector.extract_strided_slice %2 {offsets = [0, 0], sizes = [2, 128], strides = [1, 1]} : vector<2x256xf32> to vector<2x128xf32>
    %4 = vector.extract_strided_slice %2 {offsets = [0, 128], sizes = [2, 128], strides = [1, 1]} : vector<2x256xf32> to vector<2x128xf32>
    %c0_3 = arith.constant 0 : index
    %c0_4 = arith.constant 0 : index
    %5 = vector.load %arg4[%c0_3, %c0_4] : memref<1x128xf32, #tpu.memory_space<vmem>>, vector<1x128xf32>
    %6 = vector.broadcast %5 : vector<1x128xf32> to vector<2x128xf32>
    %7 = arith.addf %4, %6 : vector<2x128xf32>
    %cst_5 = arith.constant 0.000000e+00 : f32
    %8 = vector.broadcast %cst_5 : f32 to vector<2x128xf32>
    %9 = arith.maximumf %7, %8 : vector<2x128xf32>
    %cst_6 = arith.constant 0.00999999977 : f32
    %10 = vector.broadcast %cst_6 : f32 to vector<2x128xf32>
    %11 = arith.mulf %10, %3 : vector<2x128xf32>
    %12 = arith.addf %9, %11 : vector<2x128xf32>
    %c0_7 = arith.constant 0 : index
    %c0_8 = arith.constant 0 : index
    %13 = vector.load %arg2[%c0_7, %c0_8] : memref<2x768xbf16, #tpu.memory_space<vmem>>, vector<2x768xbf16>
    %c0_9 = arith.constant 0 : index
    %c0_10 = arith.constant 0 : index
    %14 = vector.load %arg5[%c0_9, %c0_10] : memref<768x512xbf16, #tpu.memory_space<vmem>>, vector<768x512xbf16>
    %cst_11 = arith.constant dense<0.000000e+00> : vector<2x512xf32>
    %15 = tpu.matmul %13, %14, %cst_11 {dimension_numbers = #tpu.dot_dimension_numbers<[1], [0], [0], [1], [0, 0, 1, 1], [], []>} : vector<2x768xbf16>, vector<768x512xbf16>, vector<2x512xf32> -> vector<2x512xf32>
    %c0_12 = arith.constant 0 : index
    %c0_13 = arith.constant 0 : index
    %16 = vector.load %arg6[%c0_12, %c0_13] : memref<1x512xf32, #tpu.memory_space<vmem>>, vector<1x512xf32>
    %17 = vector.broadcast %16 : vector<1x512xf32> to vector<2x512xf32>
    %18 = arith.addf %15, %17 : vector<2x512xf32>
    %cst_14 = arith.constant 0.000000e+00 : f32
    %19 = vector.broadcast %cst_14 : f32 to vector<2x512xf32>
    %20 = arith.maximumf %18, %19 : vector<2x512xf32>
    %21 = arith.truncf %20 : vector<2x512xf32> to vector<2x512xbf16>
    %c0_15 = arith.constant 0 : index
    %c0_16 = arith.constant 0 : index
    %22 = vector.load %arg7[%c0_15, %c0_16] : memref<512x128xbf16, #tpu.memory_space<vmem>>, vector<512x128xbf16>
    %cst_17 = arith.constant dense<0.000000e+00> : vector<2x128xf32>
    %23 = tpu.matmul %21, %22, %cst_17 {dimension_numbers = #tpu.dot_dimension_numbers<[1], [0], [0], [1], [0, 0, 1, 1], [], []>} : vector<2x512xbf16>, vector<512x128xbf16>, vector<2x128xf32> -> vector<2x128xf32>
    %c0_18 = arith.constant 0 : index
    %c0_19 = arith.constant 0 : index
    %24 = vector.load %arg8[%c0_18, %c0_19] : memref<1x128xf32, #tpu.memory_space<vmem>>, vector<1x128xf32>
    %25 = vector.broadcast %24 : vector<1x128xf32> to vector<2x128xf32>
    %26 = arith.addf %23, %25 : vector<2x128xf32>
    %27 = arith.mulf %12, %12 : vector<2x128xf32>
    %cst_20 = arith.constant dense<0.000000e+00> : vector<2xf32>
    %28 = vector.multi_reduction <add>, %27, %cst_20 [1] : vector<2x128xf32> to vector<2xf32>
    %29 = vector.shape_cast %28 : vector<2xf32> to vector<2x1xf32>
    %30 = arith.mulf %26, %26 : vector<2x128xf32>
    %cst_21 = arith.constant dense<0.000000e+00> : vector<2xf32>
    %31 = vector.multi_reduction <add>, %30, %cst_21 [1] : vector<2x128xf32> to vector<2xf32>
    %32 = vector.shape_cast %31 : vector<2xf32> to vector<2x1xf32>
    %33 = arith.mulf %12, %26 : vector<2x128xf32>
    %cst_22 = arith.constant dense<0.000000e+00> : vector<2xf32>
    %34 = vector.multi_reduction <add>, %33, %cst_22 [1] : vector<2x128xf32> to vector<2xf32>
    %35 = vector.shape_cast %34 : vector<2xf32> to vector<2x1xf32>
    %36 = arith.mulf %29, %32 : vector<2x1xf32>
    %cst_23 = arith.constant 9.99999996E-13 : f32
    %37 = vector.broadcast %cst_23 : f32 to vector<2x1xf32>
    %38 = arith.addf %36, %37 : vector<2x1xf32>
    %39 = math.rsqrt %38 : vector<2x1xf32>
    %40 = arith.mulf %35, %39 : vector<2x1xf32>
    %41 = arith.truncf %12 : vector<2x128xf32> to vector<2x128xbf16>
    %42 = arith.truncf %26 : vector<2x128xf32> to vector<2x128xbf16>
    %43 = tpu.concatenate %41, %42 in 1 : vector<2x128xbf16>, vector<2x128xbf16> -> vector<2x256xbf16>
    %c0_24 = arith.constant 0 : index
    %c0_25 = arith.constant 0 : index
    %44 = vector.load %arg9[%c0_24, %c0_25] : memref<256x128xbf16, #tpu.memory_space<vmem>>, vector<256x128xbf16>
    %cst_26 = arith.constant dense<0.000000e+00> : vector<2x128xf32>
    %45 = tpu.matmul %43, %44, %cst_26 {dimension_numbers = #tpu.dot_dimension_numbers<[1], [0], [0], [1], [0, 0, 1, 1], [], []>} : vector<2x256xbf16>, vector<256x128xbf16>, vector<2x128xf32> -> vector<2x128xf32>
    %c0_27 = arith.constant 0 : index
    %c0_28 = arith.constant 0 : index
    %46 = vector.load %arg10[%c0_27, %c0_28] : memref<1x128xf32, #tpu.memory_space<vmem>>, vector<1x128xf32>
    %47 = vector.broadcast %46 : vector<1x128xf32> to vector<2x128xf32>
    %48 = arith.addf %45, %47 : vector<2x128xf32>
    %49 = vector.broadcast %40 : vector<2x1xf32> to vector<2x128xf32>
    %50 = arith.addf %48, %49 : vector<2x128xf32>
    %c0_29 = arith.constant 0 : index
    %c0_30 = arith.constant 0 : index
    %51 = vector.load %arg11[%c0_29, %c0_30] : memref<2x128xf32, #tpu.memory_space<vmem>>, vector<2x128xf32>
    tpu.vector_store %arg11[%c0_29, %c0_30], %50 {strides = array<i32>} : memref<2x128xf32, #tpu.memory_space<vmem>>, vector<2x128xf32>,
    return
  }
  func.func @transform_0(%arg0: i32) -> (i32, i32) {
    %c0_i32 = arith.constant 0 : i32
    %c0_i32_0 = arith.constant 0 : i32
    return %arg0, %c0_i32 : i32, i32
  }
  func.func @transform_1(%arg0: i32) -> (i32, i32) {
    %c0_i32 = arith.constant 0 : i32
    %c0_i32_0 = arith.constant 0 : i32
    return %arg0, %c0_i32 : i32, i32
  }
  func.func @transform_2(%arg0: i32) -> (i32, i32) {
    %c0_i32 = arith.constant 0 : i32
    %c0_i32_0 = arith.constant 0 : i32
    %c0_i32_1 = arith.constant 0 : i32
    return %c0_i32, %c0_i32_0 : i32, i32
  }
  func.func @transform_3(%arg0: i32) -> (i32, i32) {
    %c0_i32 = arith.constant 0 : i32
    %c0_i32_0 = arith.constant 0 : i32
    %c0_i32_1 = arith.constant 0 : i32
    return %c0_i32, %c0_i32_0 : i32, i32
  }
  func.func @transform_4(%arg0: i32) -> (i32, i32) {
    %c0_i32 = arith.constant 0 : i32
    %c0_i32_0 = arith.constant 0 : i32
    %c0_i32_1 = arith.constant 0 : i32
    return %c0_i32, %c0_i32_0 : i32, i32
  }
  func.func @transform_5(%arg0: i32) -> (i32, i32) {
    %c0_i32 = arith.constant 0 : i32
    %c0_i32_0 = arith.constant 0 : i32
    %c0_i32_1 = arith.constant 0 : i32
    return %c0_i32, %c0_i32_0 : i32, i32
  }
  func.func @transform_6(%arg0: i32) -> (i32, i32) {
    %c0_i32 = arith.constant 0 : i32
    %c0_i32_0 = arith.constant 0 : i32
    %c0_i32_1 = arith.constant 0 : i32
    return %c0_i32, %c0_i32_0 : i32, i32
  }
  func.func @transform_7(%arg0: i32) -> (i32, i32) {
    %c0_i32 = arith.constant 0 : i32
    %c0_i32_0 = arith.constant 0 : i32
    %c0_i32_1 = arith.constant 0 : i32
    return %c0_i32, %c0_i32_0 : i32, i32
  }
  func.func @transform_8(%arg0: i32) -> (i32, i32) {
    %c0_i32 = arith.constant 0 : i32
    %c0_i32_0 = arith.constant 0 : i32
    %c0_i32_1 = arith.constant 0 : i32
    return %c0_i32, %c0_i32_0 : i32, i32
  }
  func.func @transform_9(%arg0: i32) -> (i32, i32) {
    %c0_i32 = arith.constant 0 : i32
    %c0_i32_0 = arith.constant 0 : i32
    %c0_i32_1 = arith.constant 0 : i32
    return %c0_i32, %c0_i32_0 : i32, i32
  }
  func.func @transform_10(%arg0: i32) -> (i32, i32) {
    %c0_i32 = arith.constant 0 : i32
    %c0_i32_0 = arith.constant 0 : i32
    return %arg0, %c0_i32 : i32, i32
  }
}

</mosaic_0001>

<llo_original>
// kernel: tpu_custom_call.1
$region0: #{tpu_custom_call.1}
  #allocation0 [shape = 'u32[]', space=smem, size = 0x4, offset = 0x4, fixed_abs, tag = 'smem constant byte address 0x4 - core index']
  #allocation1 [shape = 'u32[144,128]{1,0:T(1,128)}', space=vmem, size = 0x12000, scoped, tag = 'internal scratch']
  %s0 = inlined_call_operand.hbm [shape: bf16[2,128], index: 0, kind: input, shape index: {}]
  %s1 = inlined_call_operand.hbm [shape: bf16[2,768], index: 1, kind: input, shape index: {}]
  %s2 = inlined_call_operand.hbm [shape: bf16[128,256], index: 2, kind: input, shape index: {}]
  %s3 = inlined_call_operand.vmem [shape: f32[1,128], index: 3, kind: input, shape index: {}]
  %s4 = inlined_call_operand.hbm [shape: bf16[768,512], index: 4, kind: input, shape index: {}]
  %s5 = inlined_call_operand.vmem [shape: f32[1,512], index: 5, kind: input, shape index: {}]
  %s6 = inlined_call_operand.hbm [shape: bf16[512,128], index: 6, kind: input, shape index: {}]
  %s7 = inlined_call_operand.vmem [shape: f32[1,128], index: 7, kind: input, shape index: {}]
  %s8 = inlined_call_operand.hbm [shape: bf16[256,128], index: 8, kind: input, shape index: {}]
  %s9 = inlined_call_operand.vmem [shape: f32[1,128], index: 9, kind: input, shape index: {}]
  %s10 = inlined_call_operand.hbm [shape: f32[2,128], index: 10, kind: output, shape index: {}]
  %s11 = sld [smem:[#allocation0]]
  $region74: #{tpu_custom_call.1} parent=0
    _
  %s13 = ssub.s32 1, %s11
  %s14 = scalar_select 0, %s13, %s11
  $region1: #{tpu_custom_call.1} parent=0
    #allocation2 [shape = 'u8[512]{0}', space=vmem, size = 0x400, scoped, tag = 'input window, operand 0, single buffered']
    #allocation3 [shape = 's32[1]{0}', space=sflag, size = 0x4, scoped, tag = 'scoped memory for tpu_custom_call.1']
    #allocation4 [shape = 's32[1]{0}', space=sflag, size = 0x4, scoped, tag = 'scoped memory for tpu_custom_call.1']
    #allocation5 [shape = 'u8[3072]{0}', space=vmem, size = 0xc00, scoped, tag = 'input window, operand 1, single buffered']
    #allocation6 [shape = 's32[1]{0}', space=sflag, size = 0x4, scoped, tag = 'scoped memory for tpu_custom_call.1']
    #allocation7 [shape = 'u8[65536]{0}', space=vmem, size = 0x10000, scoped, tag = 'input window, operand 2, single buffered']
    #allocation8 [shape = 'u8[786432]{0}', space=vmem, size = 0xc0000, scoped, tag = 'input window, operand 4, single buffered']
    #allocation9 [shape = 's32[1]{0}', space=sflag, size = 0x4, scoped, tag = 'scoped memory for tpu_custom_call.1']
    #allocation10 [shape = 'u8[131072]{0}', space=vmem, size = 0x20000, scoped, tag = 'input window, operand 6, single buffered']
    #allocation11 [shape = 'u8[65536]{0}', space=vmem, size = 0x10000, scoped, tag = 'input window, operand 8, single buffered']
    #allocation12 [shape = 's32[1]{0}', space=sflag, size = 0x4, scoped, tag = 'scoped memory for tpu_custom_call.1']
    #allocation13 [shape = 'u8[1024]{0}', space=vmem, size = 0x400, scoped, tag = 'output window, operand 0, single buffered']
    %15 = vsyncpa [#allocation3], 0
    %16 = vsyncpa [#allocation6], 0
    %17 = vsyncpa [#allocation9], 0
    %18 = vsyncpa [#allocation12], 0
    %19 = vsyncpa [#allocation4], 0
    // Predicated region
    $region2: #{tpu_custom_call.1} parent=1 // pred_check
      _
    $region3: #{tpu_custom_call.1} parent=1 // pred_check_branch
      %21 = sbr.rel (0) target = $region5
    $region4: #{tpu_custom_call.1} parent=1 // pred_region
      %s23 = ssub.s32 16, 16
      %24 = vsyncadd [#allocation3], %s23
      %s26 = sshll.u32 [#allocation2], 4
      %s27 = int_to_ptr.vmem [resolvable:$true] %s26
      %29 = dma.hbm_to_vmem [thread:$0]  %s0, 16, %s27, [#allocation3]
    $region5: #{tpu_custom_call.1} parent=1 // pred_fallthru
      _
    // Predicated region
    $region6: #{tpu_custom_call.1} parent=1 // pred_check
      _
    $region7: #{tpu_custom_call.1} parent=1 // pred_check_branch
      %31 = sbr.rel (0) target = $region9
    $region8: #{tpu_custom_call.1} parent=1 // pred_region
      %s33 = ssub.s32 96, 96
      %34 = vsyncadd [#allocation6], %s33
      %s36 = sshll.u32 [#allocation5], 4
      %s37 = int_to_ptr.vmem [resolvable:$true] %s36
      %39 = dma.hbm_to_vmem [thread:$0]  %s1, 96, %s37, [#allocation6]
    $region9: #{tpu_custom_call.1} parent=1 // pred_fallthru
      _
    // Predicated region
    $region10: #{tpu_custom_call.1} parent=1 // pred_check
      _
    $region11: #{tpu_custom_call.1} parent=1 // pred_check_branch
      %41 = sbr.rel (0) target = $region13
    $region12: #{tpu_custom_call.1} parent=1 // pred_region
      %s43 = ssub.s32 2048, 2048
      %44 = vsyncadd [#allocation6], %s43
      %s45 = sshll.u32 [#allocation7], 4
      %s46 = int_to_ptr.vmem [resolvable:$true] %s45
      %51 = dma.hbm_to_vmem [thread:$0]  %s2, 2048, %s46, [#allocation6], 128, 128, 8
    $region13: #{tpu_custom_call.1} parent=1 // pred_fallthru
      _
    // Predicated region
    $region14: #{tpu_custom_call.1} parent=1 // pred_check
      _
    $region15: #{tpu_custom_call.1} parent=1 // pred_check_branch
      %53 = sbr.rel (0) target = $region17
    $region16: #{tpu_custom_call.1} parent=1 // pred_region
      _
    $region17: #{tpu_custom_call.1} parent=1 // pred_fallthru
      _
    // Predicated region
    $region18: #{tpu_custom_call.1} parent=1 // pred_check
      _
    $region19: #{tpu_custom_call.1} parent=1 // pred_check_branch
      %55 = sbr.rel (0) target = $region21
    $region20: #{tpu_custom_call.1} parent=1 // pred_region
      %s57 = ssub.s32 24576, 24576
      %58 = vsyncadd [#allocation9], %s57
      %s59 = sshll.u32 [#allocation8], 4
      %s60 = int_to_ptr.vmem [resolvable:$true] %s59
      %65 = dma.hbm_to_vmem [thread:$0]  %s4, 24576, %s60, [#allocation9], 256, 256, 16
    $region21: #{tpu_custom_call.1} parent=1 // pred_fallthru
      _
    // Predicated region
    $region22: #{tpu_custom_call.1} parent=1 // pred_check
      _
    $region23: #{tpu_custom_call.1} parent=1 // pred_check_branch
      %67 = sbr.rel (0) target = $region25
    $region24: #{tpu_custom_call.1} parent=1 // pred_region
      _
    $region25: #{tpu_custom_call.1} parent=1 // pred_fallthru
      _
    // Predicated region
    $region26: #{tpu_custom_call.1} parent=1 // pred_check
      _
    $region27: #{tpu_custom_call.1} parent=1 // pred_check_branch
      %69 = sbr.rel (0) target = $region29
    $region28: #{tpu_custom_call.1} parent=1 // pred_region
      %s71 = ssub.s32 4096, 4096
      %72 = vsyncadd [#allocation9], %s71
      %s73 = sshll.u32 [#allocation10], 4
      %s74 = int_to_ptr.vmem [resolvable:$true] %s73
      %79 = dma.hbm_to_vmem [thread:$0]  %s6, 4096, %s74, [#allocation9], 64, 64, 4
    $region29: #{tpu_custom_call.1} parent=1 // pred_fallthru
      _
    // Predicated region
    $region30: #{tpu_custom_call.1} parent=1 // pred_check
      _
    $region31: #{tpu_custom_call.1} parent=1 // pred_check_branch
      %81 = sbr.rel (0) target = $region33
    $region32: #{tpu_custom_call.1} parent=1 // pred_region
      _
    $region33: #{tpu_custom_call.1} parent=1 // pred_fallthru
      _
    // Predicated region
    $region34: #{tpu_custom_call.1} parent=1 // pred_check
      _
    $region35: #{tpu_custom_call.1} parent=1 // pred_check_branch
      %83 = sbr.rel (0) target = $region37
    $region36: #{tpu_custom_call.1} parent=1 // pred_region
      %s85 = ssub.s32 2048, 2048
      %86 = vsyncadd [#allocation12], %s85
      %s87 = sshll.u32 [#allocation11], 4
      %s88 = int_to_ptr.vmem [resolvable:$true] %s87
      %93 = dma.hbm_to_vmem [thread:$0]  %s8, 2048, %s88, [#allocation12], 64, 64, 4
    $region37: #{tpu_custom_call.1} parent=1 // pred_fallthru
      _
    // Predicated region
    $region38: #{tpu_custom_call.1} parent=1 // pred_check
      _
    $region39: #{tpu_custom_call.1} parent=1 // pred_check_branch
      %95 = sbr.rel (0) target = $region41
    $region40: #{tpu_custom_call.1} parent=1 // pred_region
      _
    $region41: #{tpu_custom_call.1} parent=1 // pred_fallthru
      _
    // Predicated region
    $region42: #{tpu_custom_call.1} parent=1 // pred_check
      _
    $region43: #{tpu_custom_call.1} parent=1 // pred_check_branch
      %97 = sbr.rel (0) target = $region45
    $region44: #{tpu_custom_call.1} parent=1 // pred_region
      %98 = dma.done [#allocation3], 16
    $region45: #{tpu_custom_call.1} parent=1 // pred_fallthru
      _
    // Predicated region
    $region46: #{tpu_custom_call.1} parent=1 // pred_check
      _
    $region47: #{tpu_custom_call.1} parent=1 // pred_check_branch
      %100 = sbr.rel (0) target = $region49
    $region48: #{tpu_custom_call.1} parent=1 // pred_region
      %101 = dma.done [#allocation6], 96
    $region49: #{tpu_custom_call.1} parent=1 // pred_fallthru
      _
    // Predicated region
    $region50: #{tpu_custom_call.1} parent=1 // pred_check
      _
    $region51: #{tpu_custom_call.1} parent=1 // pred_check_branch
      %103 = sbr.rel (0) target = $region53
    $region52: #{tpu_custom_call.1} parent=1 // pred_region
      %104 = dma.done [#allocation6], 2048
    $region53: #{tpu_custom_call.1} parent=1 // pred_fallthru
      _
    // Predicated region
    $region54: #{tpu_custom_call.1} parent=1 // pred_check
      _
    $region55: #{tpu_custom_call.1} parent=1 // pred_check_branch
      %106 = sbr.rel (0) target = $region57
    $region56: #{tpu_custom_call.1} parent=1 // pred_region
      %107 = dma.done [#allocation9], 24576
    $region57: #{tpu_custom_call.1} parent=1 // pred_fallthru
      _
    // Predicated region
    $region58: #{tpu_custom_call.1} parent=1 // pred_check
      _
    $region59: #{tpu_custom_call.1} parent=1 // pred_check_branch
      %109 = sbr.rel (0) target = $region61
    $region60: #{tpu_custom_call.1} parent=1 // pred_region
      %110 = dma.done [#allocation9], 4096
    $region61: #{tpu_custom_call.1} parent=1 // pred_fallthru
      _
    // Predicated region
    $region62: #{tpu_custom_call.1} parent=1 // pred_check
      _
    $region63: #{tpu_custom_call.1} parent=1 // pred_check_branch
      %112 = sbr.rel (0) target = $region65
    $region64: #{tpu_custom_call.1} parent=1 // pred_region
      %113 = dma.done [#allocation12], 2048
    $region65: #{tpu_custom_call.1} parent=1 // pred_fallthru
      _
    %v115 = vld [vmem:[#allocation2] sm:$0x1]
    %v116 = vld [vmem:[#allocation7] sm:$0xff]
    %v117 = vld [vmem:[#allocation7 + $0x8] sm:$0xff]
    %v118 = vld [vmem:[#allocation7 + $0x10] sm:$0xff]
    %v119 = vld [vmem:[#allocation7 + $0x18] sm:$0xff]
    %v120 = vld [vmem:[#allocation7 + $0x20] sm:$0xff]
    %v121 = vld [vmem:[#allocation7 + $0x28] sm:$0xff]
    %v122 = vld [vmem:[#allocation7 + $0x30] sm:$0xff]
    %v123 = vld [vmem:[#allocation7 + $0x38] sm:$0xff]
    %v124 = vld [vmem:[#allocation7 + $0x40] sm:$0xff]
    %v125 = vld [vmem:[#allocation7 + $0x48] sm:$0xff]
    %v126 = vld [vmem:[#allocation7 + $0x50] sm:$0xff]
    %v127 = vld [vmem:[#allocation7 + $0x58] sm:$0xff]
    %v128 = vld [vmem:[#allocation7 + $0x60] sm:$0xff]
    %v129 = vld [vmem:[#allocation7 + $0x68] sm:$0xff]
    %v130 = vld [vmem:[#allocation7 + $0x70] sm:$0xff]
    %v131 = vld [vmem:[#allocation7 + $0x78] sm:$0xff]
    %v148 = vunpack.c.l.b16 %v116
    %v149 = vunpack.c.h.b16 %v116
    %v150 = vunpack.c.l.b16 %v117
    %v151 = vunpack.c.h.b16 %v117
    %v152 = vunpack.c.l.b16 %v118
    %v153 = vunpack.c.h.b16 %v118
    %v154 = vunpack.c.l.b16 %v119
    %v155 = vunpack.c.h.b16 %v119
    %v156 = vunpack.c.l.b16 %v120
    %v157 = vunpack.c.h.b16 %v120
    %v158 = vunpack.c.l.b16 %v121
    %v159 = vunpack.c.h.b16 %v121
    %v160 = vunpack.c.l.b16 %v122
    %v161 = vunpack.c.h.b16 %v122
    %v162 = vunpack.c.l.b16 %v123
    %v163 = vunpack.c.h.b16 %v123
    %v164 = vunpack.c.l.b16 %v124
    %v165 = vunpack.c.h.b16 %v124
    %v166 = vunpack.c.l.b16 %v125
    %v167 = vunpack.c.h.b16 %v125
    %v168 = vunpack.c.l.b16 %v126
    %v169 = vunpack.c.h.b16 %v126
    %v170 = vunpack.c.l.b16 %v127
    %v171 = vunpack.c.h.b16 %v127
    %v172 = vunpack.c.l.b16 %v128
    %v173 = vunpack.c.h.b16 %v128
    %v174 = vunpack.c.l.b16 %v129
    %v175 = vunpack.c.h.b16 %v129
    %v176 = vunpack.c.l.b16 %v130
    %v177 = vunpack.c.h.b16 %v130
    %v178 = vunpack.c.l.b16 %v131
    %v179 = vunpack.c.h.b16 %v131
    %v180 = vpack.c.b16 %v150, %v148
    %v181 = vpack.c.b16 %v151, %v149
    %v182 = vpack.c.b16 %v154, %v152
    %v183 = vpack.c.b16 %v155, %v153
    %v184 = vpack.c.b16 %v158, %v156
    %v185 = vpack.c.b16 %v159, %v157
    %v186 = vpack.c.b16 %v162, %v160
    %v187 = vpack.c.b16 %v163, %v161
    %v188 = vpack.c.b16 %v166, %v164
    %v189 = vpack.c.b16 %v167, %v165
    %v190 = vpack.c.b16 %v170, %v168
    %v191 = vpack.c.b16 %v171, %v169
    %v192 = vpack.c.b16 %v174, %v172
    %v193 = vpack.c.b16 %v175, %v173
    %v194 = vpack.c.b16 %v178, %v176
    %v195 = vpack.c.b16 %v179, %v177
    %212 = vmatprep.subr.bf16.mxu0 %v195
    %213 = vmatpush1.bf16.msra.mxu0 %v194
    %214 = vmatprep.subr.bf16.mxu0 %v193
    %215 = vmatpush1.bf16.msra.mxu0 %v192
    %216 = vmatprep.subr.bf16.mxu0 %v191
    %217 = vmatpush1.bf16.msra.mxu0 %v190
    %218 = vmatprep.subr.bf16.mxu0 %v189
    %219 = vmatpush1.bf16.msra.mxu0 %v188
    %220 = vmatprep.subr.bf16.mxu0 %v187
    %221 = vmatpush1.bf16.msra.mxu0 %v186
    %222 = vmatprep.subr.bf16.mxu0 %v185
    %223 = vmatpush1.bf16.msra.mxu0 %v184
    %224 = vmatprep.subr.bf16.mxu0 %v183
    %225 = vmatpush1.bf16.msra.mxu0 %v182
    %226 = vmatprep.subr.bf16.mxu0 %v181
    %227 = vmatpush1.bf16.msra.mxu0 %v180
    %228 = vmatprep.subr.bf16.mxu0 0
    %229 = vmatpush2.bf16.msra.mxu0 0
    %230 = vmatprep.subr.bf16.mxu0 0
    %231 = vmatpush2.bf16.msra.mxu0 0
    %232 = vmatprep.subr.bf16.mxu0 0
    %233 = vmatpush2.bf16.msra.mxu0 0
    %234 = vmatprep.subr.bf16.mxu0 0
    %235 = vmatpush2.bf16.msra.mxu0 0
    %236 = vmatprep.subr.bf16.mxu0 0
    %237 = vmatpush2.bf16.msra.mxu0 0
    %238 = vmatprep.subr.bf16.mxu0 0
    %239 = vmatpush2.bf16.msra.mxu0 0
    %240 = vmatprep.subr.bf16.mxu0 0
    %241 = vmatpush2.bf16.msra.mxu0 0
    %242 = vmatprep.subr.bf16.mxu0 0
    %243 = vmatpush2.bf16.msra.mxu0 0
    %244 = vmatprep.mubr.bf16.mxu0 0
    %245 = vmatmul.mubr.bf16.gmra.mxu0 %v115
    %v246 = vpop.f32.mrf.mxu0
    %v247 = vadd.f32 0.0, %v246
    %v248 = vpop.f32.mrf.mxu0
    %v249 = vadd.f32 0.0, %v248
    %v250 = vpop.f32.mrf.mxu0
    %v251 = vpop.f32.mrf.mxu0
    %252 = vdwg.mxu0
    %v253 = vld [vmem:[%s3] sm:$0x1]
    %v255 = vlaneseq
    %v256 = vshrl.u32 %v255, 7
    %v257 = vsub.s32 0, %v256
    %v258 = vrot.slane %v253, %v257
    %v260 = vadd.f32 %v249, %v258
    %v261 = vmax.f32 %v260, 0.0
    %v262 = vmul.f32 %v247, 0.01
    %v263 = vadd.f32 %v261, %v262
    %v264 = vld [vmem:[#allocation5] sm:$0x3f]
    %v265 = vld [vmem:[#allocation8] sm:$0xff]
    %v266 = vld [vmem:[#allocation8 + $0x8] sm:$0xff]
    %v267 = vld [vmem:[#allocation8 + $0x10] sm:$0xff]
    %v268 = vld [vmem:[#allocation8 + $0x18] sm:$0xff]
    %v269 = vld [vmem:[#allocation8 + $0x20] sm:$0xff]
    %v270 = vld [vmem:[#allocation8 + $0x28] sm:$0xff]
    %v271 = vld [vmem:[#allocation8 + $0x30] sm:$0xff]
    %v272 = vld [vmem:[#allocation8 + $0x38] sm:$0xff]
    %v273 = vld [vmem:[#allocation8 + $0x40] sm:$0xff]
    %v274 = vld [vmem:[#allocation8 + $0x48] sm:$0xff]
    %v275 = vld [vmem:[#allocation8 + $0x50] sm:$0xff]
    %v276 = vld [vmem:[#allocation8 + $0x58] sm:$0xff]
    %v277 = vld [vmem:[#allocation8 + $0x60] sm:$0xff]
    %v278 = vld [vmem:[#allocation8 + $0x68] sm:$0xff]
    %v279 = vld [vmem:[#allocation8 + $0x70] sm:$0xff]
    %v280 = vld [vmem:[#allocation8 + $0x78] sm:$0xff]
    %v281 = vld [vmem:[#allocation8 + $0x80] sm:$0xff]
    %v282 = vld [vmem:[#allocation8 + $0x88] sm:$0xff]
    %v283 = vld [vmem:[#allocation8 + $0x90] sm:$0xff]
    %v284 = vld [vmem:[#allocation8 + $0x98] sm:$0xff]
    %v285 = vld [vmem:[#allocation8 + $0xa0] sm:$0xff]
    %v286 = vld [vmem:[#allocation8 + $0xa8] sm:$0xff]
    %v287 = vld [vmem:[#allocation8 + $0xb0] sm:$0xff]
    %v288 = vld [vmem:[#allocation8 + $0xb8] sm:$0xff]
    %v289 = vld [vmem:[#allocation8 + $0xc0] sm:$0xff]
    %v290 = vld [vmem:[#allocation8 + $0xc8] sm:$0xff]
    %v291 = vld [vmem:[#allocation8 + $0xd0] sm:$0xff]
    %v292 = vld [vmem:[#allocation8 + $0xd8] sm:$0xff]
    %v293 = vld [vmem:[#allocation8 + $0xe0] sm:$0xff]
    %v294 = vld [vmem:[#allocation8 + $0xe8] sm:$0xff]
    %v295 = vld [vmem:[#allocation8 + $0xf0] sm:$0xff]
    %v296 = vld [vmem:[#allocation8 + $0xf8] sm:$0xff]
    %v297 = vld [vmem:[#allocation8 + $0x100] sm:$0xff]
    %v298 = vld [vmem:[#allocation8 + $0x108] sm:$0xff]
    %v299 = vld [vmem:[#allocation8 + $0x110] sm:$0xff]
    %v300 = vld [vmem:[#allocation8 + $0x118] sm:$0xff]
    %v301 = vld [vmem:[#allocation8 + $0x120] sm:$0xff]
    %v302 = vld [vmem:[#allocation8 + $0x128] sm:$0xff]
    %v303 = vld [vmem:[#allocation8 + $0x130] sm:$0xff]
    %v304 = vld [vmem:[#allocation8 + $0x138] sm:$0xff]
    %v305 = vld [vmem:[#allocation8 + $0x140] sm:$0xff]
    %v306 = vld [vmem:[#allocation8 + $0x148] sm:$0xff]
    %v307 = vld [vmem:[#allocation8 + $0x150] sm:$0xff]
    %v308 = vld [vmem:[#allocation8 + $0x158] sm:$0xff]
    %v309 = vld [vmem:[#allocation8 + $0x160] sm:$0xff]
    %v310 = vld [vmem:[#allocation8 + $0x168] sm:$0xff]
    %v311 = vld [vmem:[#allocation8 + $0x170] sm:$0xff]
    %v312 = vld [vmem:[#allocation8 + $0x178] sm:$0xff]
    %v313 = vld [vmem:[#allocation8 + $0x180] sm:$0xff]
    %v314 = vld [vmem:[#allocation8 + $0x188] sm:$0xff]
    %v315 = vld [vmem:[#allocation8 + $0x190] sm:$0xff]
    %v316 = vld [vmem:[#allocation8 + $0x198] sm:$0xff]
    %v317 = vld [vmem:[#allocation8 + $0x1a0] sm:$0xff]
    %v318 = vld [vmem:[#allocation8 + $0x1a8] sm:$0xff]
    %v319 = vld [vmem:[#allocation8 + $0x1b0] sm:$0xff]
    %v320 = vld [vmem:[#allocation8 + $0x1b8] sm:$0xff]
    %v321 = vld [vmem:[#allocation8 + $0x1c0] sm:$0xff]
    %v322 = vld [vmem:[#allocation8 + $0x1c8] sm:$0xff]
    %v323 = vld [vmem:[#allocation8 + $0x1d0] sm:$0xff]
    %v324 = vld [vmem:[#allocation8 + $0x1d8] sm:$0xff]
    %v325 = vld [vmem:[#allocation8 + $0x1e0] sm:$0xff]
    %v326 = vld [vmem:[#allocation8 + $0x1e8] sm:$0xff]
    %v327 = vld [vmem:[#allocation8 + $0x1f0] sm:$0xff]
    %v328 = vld [vmem:[#allocation8 + $0x1f8] sm:$0xff]
    %v329 = vld [vmem:[#allocation8 + $0x200] sm:$0xff]
    %v330 = vld [vmem:[#allocation8 + $0x208] sm:$0xff]
    %v331 = vld [vmem:[#allocation8 + $0x210] sm:$0xff]
    %v332 = vld [vmem:[#allocation8 + $0x218] sm:$0xff]
    %v333 = vld [vmem:[#allocation8 + $0x220] sm:$0xff]
    %v334 = vld [vmem:[#allocation8 + $0x228] sm:$0xff]
    %v335 = vld [vmem:[#allocation8 + $0x230] sm:$0xff]
    %v336 = vld [vmem:[#allocation8 + $0x238] sm:$0xff]
    %v337 = vld [vmem:[#allocation8 + $0x240] sm:$0xff]
    %v338 = vld [vmem:[#allocation8 + $0x248] sm:$0xff]
    %v339 = vld [vmem:[#allocation8 + $0x250] sm:$0xff]
    %v340 = vld [vmem:[#allocation8 + $0x258] sm:$0xff]
    %v341 = vld [vmem:[#allocation8 + $0x260] sm:$0xff]
    %v342 = vld [vmem:[#allocation8 + $0x268] sm:$0xff]
    %v343 = vld [vmem:[#allocation8 + $0x270] sm:$0xff]
    %v344 = vld [vmem:[#allocation8 + $0x278] sm:$0xff]
    %v345 = vld [vmem:[#allocation8 + $0x280] sm:$0xff]
    %v346 = vld [vmem:[#allocation8 + $0x288] sm:$0xff]
    %v347 = vld [vmem:[#allocation8 + $0x290] sm:$0xff]
    %v348 = vld [vmem:[#allocation8 + $0x298] sm:$0xff]
    %v349 = vld [vmem:[#allocation8 + $0x2a0] sm:$0xff]
    %v350 = vld [vmem:[#allocation8 + $0x2a8] sm:$0xff]
    %v351 = vld [vmem:[#allocation8 + $0x2b0] sm:$0xff]
    %v352 = vld [vmem:[#allocation8 + $0x2b8] sm:$0xff]
    %v353 = vld [vmem:[#allocation8 + $0x2c0] sm:$0xff]
    %v354 = vld [vmem:[#allocation8 + $0x2c8] sm:$0xff]
    %v355 = vld [vmem:[#allocation8 + $0x2d0] sm:$0xff]
    %v356 = vld [vmem:[#allocation8 + $0x2d8] sm:$0xff]
    %v357 = vld [vmem:[#allocation8 + $0x2e0] sm:$0xff]
    %v358 = vld [vmem:[#allocation8 + $0x2e8] sm:$0xff]
    %v359 = vld [vmem:[#allocation8 + $0x2f0] sm:$0xff]
    %v360 = vld [vmem:[#allocation8 + $0x2f8] sm:$0xff]
    %v361 = vld [vmem:[#allocation8 + $0x300] sm:$0xff]
    %v362 = vld [vmem:[#allocation8 + $0x308] sm:$0xff]
    %v363 = vld [vmem:[#allocation8 + $0x310] sm:$0xff]
    %v364 = vld [vmem:[#allocation8 + $0x318] sm:$0xff]
    %v365 = vld [vmem:[#allocation8 + $0x320] sm:$0xff]
    %v366 = vld [vmem:[#allocation8 + $0x328] sm:$0xff]
    %v367 = vld [vmem:[#allocation8 + $0x330] sm:$0xff]
    %v368 = vld [vmem:[#allocation8 + $0x338] sm:$0xff]
    %v369 = vld [vmem:[#allocation8 + $0x340] sm:$0xff]
    %v370 = vld [vmem:[#allocation8 + $0x348] sm:$0xff]
    %v371 = vld [vmem:[#allocation8 + $0x350] sm:$0xff]
    %v372 = vld [vmem:[#allocation8 + $0x358] sm:$0xff]
    %v373 = vld [vmem:[#allocation8 + $0x360] sm:$0xff]
    %v374 = vld [vmem:[#allocation8 + $0x368] sm:$0xff]
    %v375 = vld [vmem:[#allocation8 + $0x370] sm:$0xff]
    %v376 = vld [vmem:[#allocation8 + $0x378] sm:$0xff]
    %v377 = vld [vmem:[#allocation8 + $0x380] sm:$0xff]
    %v378 = vld [vmem:[#allocation8 + $0x388] sm:$0xff]
    %v379 = vld [vmem:[#allocation8 + $0x390] sm:$0xff]
    %v380 = vld [vmem:[#allocation8 + $0x398] sm:$0xff]
    %v381 = vld [vmem:[#allocation8 + $0x3a0] sm:$0xff]
    %v382 = vld [vmem:[#allocation8 + $0x3a8] sm:$0xff]
    %v383 = vld [vmem:[#allocation8 + $0x3b0] sm:$0xff]
    %v384 = vld [vmem:[#allocation8 + $0x3b8] sm:$0xff]
    %v385 = vld [vmem:[#allocation8 + $0x3c0] sm:$0xff]
    %v386 = vld [vmem:[#allocation8 + $0x3c8] sm:$0xff]
    %v387 = vld [vmem:[#allocation8 + $0x3d0] sm:$0xff]
    %v388 = vld [vmem:[#allocation8 + $0x3d8] sm:$0xff]
    %v389 = vld [vmem:[#allocation8 + $0x3e0] sm:$0xff]
    %v390 = vld [vmem:[#allocation8 + $0x3e8] sm:$0xff]
    %v391 = vld [vmem:[#allocation8 + $0x3f0] sm:$0xff]
    %v392 = vld [vmem:[#allocation8 + $0x3f8] sm:$0xff]
    %v393 = vld [vmem:[#allocation8 + $0x400] sm:$0xff]
    %v394 = vld [vmem:[#allocation8 + $0x408] sm:$0xff]
    %v395 = vld [vmem:[#allocation8 + $0x410] sm:$0xff]
    %v396 = vld [vmem:[#allocation8 + $0x418] sm:$0xff]
    %v397 = vld [vmem:[#allocation8 + $0x420] sm:$0xff]
    %v398 = vld [vmem:[#allocation8 + $0x428] sm:$0xff]
    %v399 = vld [vmem:[#allocation8 + $0x430] sm:$0xff]
    %v400 = vld [vmem:[#allocation8 + $0x438] sm:$0xff]
    %v401 = vld [vmem:[#allocation8 + $0x440] sm:$0xff]
    %v402 = vld [vmem:[#allocation8 + $0x448] sm:$0xff]
    %v403 = vld [vmem:[#allocation8 + $0x450] sm:$0xff]
    %v404 = vld [vmem:[#allocation8 + $0x458] sm:$0xff]
    %v405 = vld [vmem:[#allocation8 + $0x460] sm:$0xff]
    %v406 = vld [vmem:[#allocation8 + $0x468] sm:$0xff]
    %v407 = vld [vmem:[#allocation8 + $0x470] sm:$0xff]
    %v408 = vld [vmem:[#allocation8 + $0x478] sm:$0xff]
    %v409 = vld [vmem:[#allocation8 + $0x480] sm:$0xff]
    %v410 = vld [vmem:[#allocation8 + $0x488] sm:$0xff]
    %v411 = vld [vmem:[#allocation8 + $0x490] sm:$0xff]
    %v412 = vld [vmem:[#allocation8 + $0x498] sm:$0xff]
    %v413 = vld [vmem:[#allocation8 + $0x4a0] sm:$0xff]
    %v414 = vld [vmem:[#allocation8 + $0x4a8] sm:$0xff]
    %v415 = vld [vmem:[#allocation8 + $0x4b0] sm:$0xff]
    %v416 = vld [vmem:[#allocation8 + $0x4b8] sm:$0xff]
    %v417 = vld [vmem:[#allocation8 + $0x4c0] sm:$0xff]
    %v418 = vld [vmem:[#allocation8 + $0x4c8] sm:$0xff]
    %v419 = vld [vmem:[#allocation8 + $0x4d0] sm:$0xff]
    %v420 = vld [vmem:[#allocation8 + $0x4d8] sm:$0xff]
    %v421 = vld [vmem:[#allocation8 + $0x4e0] sm:$0xff]
    %v422 = vld [vmem:[#allocation8 + $0x4e8] sm:$0xff]
    %v423 = vld [vmem:[#allocation8 + $0x4f0] sm:$0xff]
    %v424 = vld [vmem:[#allocation8 + $0x4f8] sm:$0xff]
    %v425 = vld [vmem:[#allocation8 + $0x500] sm:$0xff]
    %v426 = vld [vmem:[#allocation8 + $0x508] sm:$0xff]
    %v427 = vld [vmem:[#allocation8 + $0x510] sm:$0xff]
    %v428 = vld [vmem:[#allocation8 + $0x518] sm:$0xff]
    %v429 = vld [vmem:[#allocation8 + $0x520] sm:$0xff]
    %v430 = vld [vmem:[#allocation8 + $0x528] sm:$0xff]
    %v431 = vld [vmem:[#allocation8 + $0x530] sm:$0xff]
    %v432 = vld [vmem:[#allocation8 + $0x538] sm:$0xff]
    %v433 = vld [vmem:[#allocation8 + $0x540] sm:$0xff]
    %v434 = vld [vmem:[#allocation8 + $0x548] sm:$0xff]
    %v435 = vld [vmem:[#allocation8 + $0x550] sm:$0xff]
    %v436 = vld [vmem:[#allocation8 + $0x558] sm:$0xff]
    %v437 = vld [vmem:[#allocation8 + $0x560] sm:$0xff]
    %v438 = vld [vmem:[#allocation8 + $0x568] sm:$0xff]
    %v439 = vld [vmem:[#allocation8 + $0x570] sm:$0xff]
    %v440 = vld [vmem:[#allocation8 + $0x578] sm:$0xff]
    %v441 = vld [vmem:[#allocation8 + $0x580] sm:$0xff]
    %v442 = vld [vmem:[#allocation8 + $0x588] sm:$0xff]
    %v443 = vld [vmem:[#allocation8 + $0x590] sm:$0xff]
    %v444 = vld [vmem:[#allocation8 + $0x598] sm:$0xff]
    %v445 = vld [vmem:[#allocation8 + $0x5a0] sm:$0xff]
    %v446 = vld [vmem:[#allocation8 + $0x5a8] sm:$0xff]
    %v447 = vld [vmem:[#allocation8 + $0x5b0] sm:$0xff]
    %v448 = vld [vmem:[#allocation8 + $0x5b8] sm:$0xff]
    %v449 = vld [vmem:[#allocation8 + $0x5c0] sm:$0xff]
    %v450 = vld [vmem:[#allocation8 + $0x5c8] sm:$0xff]
    %v451 = vld [vmem:[#allocation8 + $0x5d0] sm:$0xff]
    %v452 = vld [vmem:[#allocation8 + $0x5d8] sm:$0xff]
    %v453 = vld [vmem:[#allocation8 + $0x5e0] sm:$0xff]
    %v454 = vld [vmem:[#allocation8 + $0x5e8] sm:$0xff]
    %v455 = vld [vmem:[#allocation8 + $0x5f0] sm:$0xff]
    %v456 = vld [vmem:[#allocation8 + $0x5f8] sm:$0xff]
    %v457 = vld [vmem:[%s5] sm:$0xf]
    %v459 = vlaneseq
    %v460 = vshrl.u32 %v459, 7
    %v461 = vsub.s32 0, %v460
    %v462 = vrot.slane %v457, %v461
    %v463 = vlaneseq
    %v464 = vshrl.u32 %v463, 7
    %v465 = vsub.s32 1, %v464
    %v466 = vrot.slane %v457, %v465
    %v467 = vlaneseq
    %v468 = vshrl.u32 %v467, 7
    %v469 = vsub.s32 2, %v468
    %v470 = vrot.slane %v457, %v469
    %v471 = vlaneseq
    %v472 = vshrl.u32 %v471, 7
    %v473 = vsub.s32 3, %v472
    %v474 = vrot.slane %v457, %v473
    %v480 = vcombine.high %v264, %v264
    %v482 = vunpack.c.l.s4 1966171168
    %v483 = vunpack.c.0.s8 %v482
    %v484 = vlaneseq
    %v485 = vshrl.u32 %v484, 7
    %v486 = vsub.s32 %v483, %v485
    %v487 = vrot.slane %v264, %v486
    %v489 = vunpack.c.l.s4 1966171168
    %v490 = vunpack.c.0.s8 %v489
    %v491 = vlaneseq
    %v492 = vshrl.u32 %v491, 7
    %v493 = vsub.s32 %v490, %v492
    %v494 = vrot.slane %v480, %v493
    %v495 = vcombine.high %v487, %v487
    %v496 = vcombine.high %v494, %v494
    %v498 = vunpack.c.l.s4 1966171168
    %v499 = vunpack.c.0.s8 %v498
    %v500 = vlaneseq
    %v501 = vshrl.u32 %v500, 7
    %v502 = vsub.s32 %v499, %v501
    %v503 = vrot.slane %v487, %v502
    %v505 = vunpack.c.l.s4 1966171168
    %v506 = vunpack.c.0.s8 %v505
    %v507 = vlaneseq
    %v508 = vshrl.u32 %v507, 7
    %v509 = vsub.s32 %v506, %v508
    %v510 = vrot.slane %v494, %v509
    %v512 = vunpack.c.l.s4 1966171168
    %v513 = vunpack.c.0.s8 %v512
    %v514 = vlaneseq
    %v515 = vshrl.u32 %v514, 7
    %v516 = vsub.s32 %v513, %v515
    %v517 = vrot.slane %v495, %v516
    %v519 = vunpack.c.l.s4 1966171168
    %v520 = vunpack.c.0.s8 %v519
    %v521 = vlaneseq
    %v522 = vshrl.u32 %v521, 7
    %v523 = vsub.s32 %v520, %v522
    %v524 = vrot.slane %v496, %v523
    %v525 = vcombine.high %v503, %v503
    %v526 = vcombine.high %v517, %v517
    %v725 = vunpack.c.l.b16 %v265
    %v726 = vunpack.c.h.b16 %v265
    %v727 = vunpack.c.l.b16 %v266
    %v728 = vunpack.c.h.b16 %v266
    %v729 = vunpack.c.l.b16 %v267
    %v730 = vunpack.c.h.b16 %v267
    %v731 = vunpack.c.l.b16 %v268
    %v732 = vunpack.c.h.b16 %v268
    %v733 = vunpack.c.l.b16 %v269
    %v734 = vunpack.c.h.b16 %v269
    %v735 = vunpack.c.l.b16 %v270
    %v736 = vunpack.c.h.b16 %v270
    %v737 = vunpack.c.l.b16 %v271
    %v738 = vunpack.c.h.b16 %v271
    %v739 = vunpack.c.l.b16 %v272
    %v740 = vunpack.c.h.b16 %v272
    %v741 = vunpack.c.l.b16 %v273
    %v742 = vunpack.c.h.b16 %v273
    %v743 = vunpack.c.l.b16 %v274
    %v744 = vunpack.c.h.b16 %v274
    %v745 = vunpack.c.l.b16 %v275
    %v746 = vunpack.c.h.b16 %v275
    %v747 = vunpack.c.l.b16 %v276
    %v748 = vunpack.c.h.b16 %v276
    %v749 = vunpack.c.l.b16 %v277
    %v750 = vunpack.c.h.b16 %v277
    %v751 = vunpack.c.l.b16 %v278
    %v752 = vunpack.c.h.b16 %v278
    %v753 = vunpack.c.l.b16 %v279
    %v754 = vunpack.c.h.b16 %v279
    %v755 = vunpack.c.l.b16 %v280
    %v756 = vunpack.c.h.b16 %v280
    %v757 = vunpack.c.l.b16 %v281
    %v758 = vunpack.c.h.b16 %v281
    %v759 = vunpack.c.l.b16 %v282
    %v760 = vunpack.c.h.b16 %v282
    %v761 = vunpack.c.l.b16 %v283
    %v762 = vunpack.c.h.b16 %v283
    %v763 = vunpack.c.l.b16 %v284
    %v764 = vunpack.c.h.b16 %v284
    %v765 = vunpack.c.l.b16 %v285
    %v766 = vunpack.c.h.b16 %v285
    %v767 = vunpack.c.l.b16 %v286
    %v768 = vunpack.c.h.b16 %v286
    %v769 = vunpack.c.l.b16 %v287
    %v770 = vunpack.c.h.b16 %v287
    %v771 = vunpack.c.l.b16 %v288
    %v772 = vunpack.c.h.b16 %v288
    %v773 = vunpack.c.l.b16 %v289
    %v774 = vunpack.c.h.b16 %v289
    %v775 = vunpack.c.l.b16 %v290
    %v776 = vunpack.c.h.b16 %v290
    %v777 = vunpack.c.l.b16 %v291
    %v778 = vunpack.c.h.b16 %v291
    %v779 = vunpack.c.l.b16 %v292
    %v780 = vunpack.c.h.b16 %v292
    %v781 = vunpack.c.l.b16 %v293
    %v782 = vunpack.c.h.b16 %v293
    %v783 = vunpack.c.l.b16 %v294
    %v784 = vunpack.c.h.b16 %v294
    %v785 = vunpack.c.l.b16 %v295
    %v786 = vunpack.c.h.b16 %v295
    %v787 = vunpack.c.l.b16 %v296
    %v788 = vunpack.c.h.b16 %v296
    %v789 = vunpack.c.l.b16 %v297
    %v790 = vunpack.c.h.b16 %v297
    %v791 = vunpack.c.l.b16 %v298
    %v792 = vunpack.c.h.b16 %v298
    %v793 = vunpack.c.l.b16 %v299
    %v794 = vunpack.c.h.b16 %v299
    %v795 = vunpack.c.l.b16 %v300
    %v796 = vunpack.c.h.b16 %v300
    %v797 = vunpack.c.l.b16 %v301
    %v798 = vunpack.c.h.b16 %v301
    %v799 = vunpack.c.l.b16 %v302
    %v800 = vunpack.c.h.b16 %v302
    %v801 = vunpack.c.l.b16 %v303
    %v802 = vunpack.c.h.b16 %v303
    %v803 = vunpack.c.l.b16 %v304
    %v804 = vunpack.c.h.b16 %v304
    %v805 = vunpack.c.l.b16 %v305
    %v806 = vunpack.c.h.b16 %v305
    %v807 = vunpack.c.l.b16 %v306
    %v808 = vunpack.c.h.b16 %v306
    %v809 = vunpack.c.l.b16 %v307
    %v810 = vunpack.c.h.b16 %v307
    %v811 = vunpack.c.l.b16 %v308
    %v812 = vunpack.c.h.b16 %v308
    %v813 = vunpack.c.l.b16 %v309
    %v814 = vunpack.c.h.b16 %v309
    %v815 = vunpack.c.l.b16 %v310
    %v816 = vunpack.c.h.b16 %v310
    %v817 = vunpack.c.l.b16 %v311
    %v818 = vunpack.c.h.b16 %v311
    %v819 = vunpack.c.l.b16 %v312
    %v820 = vunpack.c.h.b16 %v312
    %v821 = vunpack.c.l.b16 %v313
    %v822 = vunpack.c.h.b16 %v313
    %v823 = vunpack.c.l.b16 %v314
    %v824 = vunpack.c.h.b16 %v314
    %v825 = vunpack.c.l.b16 %v315
    %v826 = vunpack.c.h.b16 %v315
    %v827 = vunpack.c.l.b16 %v316
    %v828 = vunpack.c.h.b16 %v316
    %v829 = vunpack.c.l.b16 %v317
    %v830 = vunpack.c.h.b16 %v317
    %v831 = vunpack.c.l.b16 %v318
    %v832 = vunpack.c.h.b16 %v318
    %v833 = vunpack.c.l.b16 %v319
    %v834 = vunpack.c.h.b16 %v319
    %v835 = vunpack.c.l.b16 %v320
    %v836 = vunpack.c.h.b16 %v320
    %v837 = vunpack.c.l.b16 %v321
    %v838 = vunpack.c.h.b16 %v321
    %v839 = vunpack.c.l.b16 %v322
    %v840 = vunpack.c.h.b16 %v322
    %v841 = vunpack.c.l.b16 %v323
    %v842 = vunpack.c.h.b16 %v323
    %v843 = vunpack.c.l.b16 %v324
    %v844 = vunpack.c.h.b16 %v324
    %v845 = vunpack.c.l.b16 %v325
    %v846 = vunpack.c.h.b16 %v325
    %v847 = vunpack.c.l.b16 %v326
    %v848 = vunpack.c.h.b16 %v326
    %v849 = vunpack.c.l.b16 %v327
    %v850 = vunpack.c.h.b16 %v327
    %v851 = vunpack.c.l.b16 %v328
    %v852 = vunpack.c.h.b16 %v328
    %v853 = vunpack.c.l.b16 %v329
    %v854 = vunpack.c.h.b16 %v329
    %v855 = vunpack.c.l.b16 %v330
    %v856 = vunpack.c.h.b16 %v330
    %v857 = vunpack.c.l.b16 %v331
    %v858 = vunpack.c.h.b16 %v331
    %v859 = vunpack.c.l.b16 %v332
    %v860 = vunpack.c.h.b16 %v332
    %v861 = vunpack.c.l.b16 %v333
    %v862 = vunpack.c.h.b16 %v333
    %v863 = vunpack.c.l.b16 %v334
    %v864 = vunpack.c.h.b16 %v334
    %v865 = vunpack.c.l.b16 %v335
    %v866 = vunpack.c.h.b16 %v335
    %v867 = vunpack.c.l.b16 %v336
    %v868 = vunpack.c.h.b16 %v336
    %v869 = vunpack.c.l.b16 %v337
    %v870 = vunpack.c.h.b16 %v337
    %v871 = vunpack.c.l.b16 %v338
    %v872 = vunpack.c.h.b16 %v338
    %v873 = vunpack.c.l.b16 %v339
    %v874 = vunpack.c.h.b16 %v339
    %v875 = vunpack.c.l.b16 %v340
    %v876 = vunpack.c.h.b16 %v340
    %v877 = vunpack.c.l.b16 %v341
    %v878 = vunpack.c.h.b16 %v341
    %v879 = vunpack.c.l.b16 %v342
    %v880 = vunpack.c.h.b16 %v342
    %v881 = vunpack.c.l.b16 %v343
    %v882 = vunpack.c.h.b16 %v343
    %v883 = vunpack.c.l.b16 %v344
    %v884 = vunpack.c.h.b16 %v344
    %v885 = vunpack.c.l.b16 %v345
    %v886 = vunpack.c.h.b16 %v345
    %v887 = vunpack.c.l.b16 %v346
    %v888 = vunpack.c.h.b16 %v346
    %v889 = vunpack.c.l.b16 %v347
    %v890 = vunpack.c.h.b16 %v347
    %v891 = vunpack.c.l.b16 %v348
    %v892 = vunpack.c.h.b16 %v348
    %v893 = vunpack.c.l.b16 %v349
    %v894 = vunpack.c.h.b16 %v349
    %v895 = vunpack.c.l.b16 %v350
    %v896 = vunpack.c.h.b16 %v350
    %v897 = vunpack.c.l.b16 %v351
    %v898 = vunpack.c.h.b16 %v351
    %v899 = vunpack.c.l.b16 %v352
    %v900 = vunpack.c.h.b16 %v352
    %v901 = vunpack.c.l.b16 %v353
    %v902 = vunpack.c.h.b16 %v353
    %v903 = vunpack.c.l.b16 %v354
    %v904 = vunpack.c.h.b16 %v354
    %v905 = vunpack.c.l.b16 %v355
    %v906 = vunpack.c.h.b16 %v355
    %v907 = vunpack.c.l.b16 %v356
    %v908 = vunpack.c.h.b16 %v356
    %v909 = vunpack.c.l.b16 %v357
    %v910 = vunpack.c.h.b16 %v357
    %v911 = vunpack.c.l.b16 %v358
    %v912 = vunpack.c.h.b16 %v358
    %v913 = vunpack.c.l.b16 %v359
    %v914 = vunpack.c.h.b16 %v359
    %v915 = vunpack.c.l.b16 %v360
    %v916 = vunpack.c.h.b16 %v360
    %v917 = vunpack.c.l.b16 %v361
    %v918 = vunpack.c.h.b16 %v361
    %v919 = vunpack.c.l.b16 %v362
    %v920 = vunpack.c.h.b16 %v362
    %v921 = vunpack.c.l.b16 %v363
    %v922 = vunpack.c.h.b16 %v363
    %v923 = vunpack.c.l.b16 %v364
    %v924 = vunpack.c.h.b16 %v364
    %v925 = vunpack.c.l.b16 %v365
    %v926 = vunpack.c.h.b16 %v365
    %v927 = vunpack.c.l.b16 %v366
    %v928 = vunpack.c.h.b16 %v366
    %v929 = vunpack.c.l.b16 %v367
    %v930 = vunpack.c.h.b16 %v367
    %v931 = vunpack.c.l.b16 %v368
    %v932 = vunpack.c.h.b16 %v368
    %v933 = vunpack.c.l.b16 %v369
    %v934 = vunpack.c.h.b16 %v369
    %v935 = vunpack.c.l.b16 %v370
    %v936 = vunpack.c.h.b16 %v370
    %v937 = vunpack.c.l.b16 %v371
    %v938 = vunpack.c.h.b16 %v371
    %v939 = vunpack.c.l.b16 %v372
    %v940 = vunpack.c.h.b16 %v372
    %v941 = vunpack.c.l.b16 %v373
    %v942 = vunpack.c.h.b16 %v373
    %v943 = vunpack.c.l.b16 %v374
    %v944 = vunpack.c.h.b16 %v374
    %v945 = vunpack.c.l.b16 %v375
    %v946 = vunpack.c.h.b16 %v375
    %v947 = vunpack.c.l.b16 %v376
    %v948 = vunpack.c.h.b16 %v376
    %v949 = vunpack.c.l.b16 %v377
    %v950 = vunpack.c.h.b16 %v377
    %v951 = vunpack.c.l.b16 %v378
    %v952 = vunpack.c.h.b16 %v378
    %v953 = vunpack.c.l.b16 %v379
    %v954 = vunpack.c.h.b16 %v379
    %v955 = vunpack.c.l.b16 %v380
    %v956 = vunpack.c.h.b16 %v380
    %v957 = vunpack.c.l.b16 %v381
    %v958 = vunpack.c.h.b16 %v381
    %v959 = vunpack.c.l.b16 %v382
    %v960 = vunpack.c.h.b16 %v382
    %v961 = vunpack.c.l.b16 %v383
    %v962 = vunpack.c.h.b16 %v383
    %v963 = vunpack.c.l.b16 %v384
    %v964 = vunpack.c.h.b16 %v384
    %v965 = vunpack.c.l.b16 %v385
    %v966 = vunpack.c.h.b16 %v385
    %v967 = vunpack.c.l.b16 %v386
    %v968 = vunpack.c.h.b16 %v386
    %v969 = vunpack.c.l.b16 %v387
    %v970 = vunpack.c.h.b16 %v387
    %v971 = vunpack.c.l.b16 %v388
    %v972 = vunpack.c.h.b16 %v388
    %v973 = vunpack.c.l.b16 %v389
    %v974 = vunpack.c.h.b16 %v389
    %v975 = vunpack.c.l.b16 %v390
    %v976 = vunpack.c.h.b16 %v390
    %v977 = vunpack.c.l.b16 %v391
    %v978 = vunpack.c.h.b16 %v391
    %v979 = vunpack.c.l.b16 %v392
    %v980 = vunpack.c.h.b16 %v392
    %v981 = vunpack.c.l.b16 %v393
    %v982 = vunpack.c.h.b16 %v393
    %v983 = vunpack.c.l.b16 %v394
    %v984 = vunpack.c.h.b16 %v394
    %v985 = vunpack.c.l.b16 %v395
    %v986 = vunpack.c.h.b16 %v395
    %v987 = vunpack.c.l.b16 %v396
    %v988 = vunpack.c.h.b16 %v396
    %v989 = vunpack.c.l.b16 %v397
    %v990 = vunpack.c.h.b16 %v397
    %v991 = vunpack.c.l.b16 %v398
    %v992 = vunpack.c.h.b16 %v398
    %v993 = vunpack.c.l.b16 %v399
    %v994 = vunpack.c.h.b16 %v399
    %v995 = vunpack.c.l.b16 %v400
    %v996 = vunpack.c.h.b16 %v400
    %v997 = vunpack.c.l.b16 %v401
    %v998 = vunpack.c.h.b16 %v401
    %v999 = vunpack.c.l.b16 %v402
    %v1000 = vunpack.c.h.b16 %v402
    %v1001 = vunpack.c.l.b16 %v403
    %v1002 = vunpack.c.h.b16 %v403
    %v1003 = vunpack.c.l.b16 %v404
    %v1004 = vunpack.c.h.b16 %v404
    %v1005 = vunpack.c.l.b16 %v405
    %v1006 = vunpack.c.h.b16 %v405
    %v1007 = vunpack.c.l.b16 %v406
    %v1008 = vunpack.c.h.b16 %v406
    %v1009 = vunpack.c.l.b16 %v407
    %v1010 = vunpack.c.h.b16 %v407
    %v1011 = vunpack.c.l.b16 %v408
    %v1012 = vunpack.c.h.b16 %v408
    %v1013 = vunpack.c.l.b16 %v409
    %v1014 = vunpack.c.h.b16 %v409
    %v1015 = vunpack.c.l.b16 %v410
    %v1016 = vunpack.c.h.b16 %v410
    %v1017 = vunpack.c.l.b16 %v411
    %v1018 = vunpack.c.h.b16 %v411
    %v1019 = vunpack.c.l.b16 %v412
    %v1020 = vunpack.c.h.b16 %v412
    %v1021 = vunpack.c.l.b16 %v413
    %v1022 = vunpack.c.h.b16 %v413
    %v1023 = vunpack.c.l.b16 %v414
    %v1024 = vunpack.c.h.b16 %v414
    %v1025 = vunpack.c.l.b16 %v415
    %v1026 = vunpack.c.h.b16 %v415
    %v1027 = vunpack.c.l.b16 %v416
    %v1028 = vunpack.c.h.b16 %v416
    %v1029 = vunpack.c.l.b16 %v417
    %v1030 = vunpack.c.h.b16 %v417
    %v1031 = vunpack.c.l.b16 %v418
    %v1032 = vunpack.c.h.b16 %v418
    %v1033 = vunpack.c.l.b16 %v419
    %v1034 = vunpack.c.h.b16 %v419
    %v1035 = vunpack.c.l.b16 %v420
    %v1036 = vunpack.c.h.b16 %v420
    %v1037 = vunpack.c.l.b16 %v421
    %v1038 = vunpack.c.h.b16 %v421
    %v1039 = vunpack.c.l.b16 %v422
    %v1040 = vunpack.c.h.b16 %v422
    %v1041 = vunpack.c.l.b16 %v423
    %v1042 = vunpack.c.h.b16 %v423
    %v1043 = vunpack.c.l.b16 %v424
    %v1044 = vunpack.c.h.b16 %v424
    %v1045 = vunpack.c.l.b16 %v425
    %v1046 = vunpack.c.h.b16 %v425
    %v1047 = vunpack.c.l.b16 %v426
    %v1048 = vunpack.c.h.b16 %v426
    %v1049 = vunpack.c.l.b16 %v427
    %v1050 = vunpack.c.h.b16 %v427
    %v1051 = vunpack.c.l.b16 %v428
    %v1052 = vunpack.c.h.b16 %v428
    %v1053 = vunpack.c.l.b16 %v429
    %v1054 = vunpack.c.h.b16 %v429
    %v1055 = vunpack.c.l.b16 %v430
    %v1056 = vunpack.c.h.b16 %v430
    %v1057 = vunpack.c.l.b16 %v431
    %v1058 = vunpack.c.h.b16 %v431
    %v1059 = vunpack.c.l.b16 %v432
    %v1060 = vunpack.c.h.b16 %v432
    %v1061 = vunpack.c.l.b16 %v433
    %v1062 = vunpack.c.h.b16 %v433
    %v1063 = vunpack.c.l.b16 %v434
    %v1064 = vunpack.c.h.b16 %v434
    %v1065 = vunpack.c.l.b16 %v435
    %v1066 = vunpack.c.h.b16 %v435
    %v1067 = vunpack.c.l.b16 %v436
    %v1068 = vunpack.c.h.b16 %v436
    %v1069 = vunpack.c.l.b16 %v437
    %v1070 = vunpack.c.h.b16 %v437
    %v1071 = vunpack.c.l.b16 %v438
    %v1072 = vunpack.c.h.b16 %v438
    %v1073 = vunpack.c.l.b16 %v439
    %v1074 = vunpack.c.h.b16 %v439
    %v1075 = vunpack.c.l.b16 %v440
    %v1076 = vunpack.c.h.b16 %v440
    %v1077 = vunpack.c.l.b16 %v441
    %v1078 = vunpack.c.h.b16 %v441
    %v1079 = vunpack.c.l.b16 %v442
    %v1080 = vunpack.c.h.b16 %v442
    %v1081 = vunpack.c.l.b16 %v443
    %v1082 = vunpack.c.h.b16 %v443
    %v1083 = vunpack.c.l.b16 %v444
    %v1084 = vunpack.c.h.b16 %v444
    %v1085 = vunpack.c.l.b16 %v445
    %v1086 = vunpack.c.h.b16 %v445
    %v1087 = vunpack.c.l.b16 %v446
    %v1088 = vunpack.c.h.b16 %v446
    %v1089 = vunpack.c.l.b16 %v447
    %v1090 = vunpack.c.h.b16 %v447
    %v1091 = vunpack.c.l.b16 %v448
    %v1092 = vunpack.c.h.b16 %v448
    %v1093 = vunpack.c.l.b16 %v449
    %v1094 = vunpack.c.h.b16 %v449
    %v1095 = vunpack.c.l.b16 %v450
    %v1096 = vunpack.c.h.b16 %v450
    %v1097 = vunpack.c.l.b16 %v451
    %v1098 = vunpack.c.h.b16 %v451
    %v1099 = vunpack.c.l.b16 %v452
    %v1100 = vunpack.c.h.b16 %v452
    %v1101 = vunpack.c.l.b16 %v453
    %v1102 = vunpack.c.h.b16 %v453
    %v1103 = vunpack.c.l.b16 %v454
    %v1104 = vunpack.c.h.b16 %v454
    %v1105 = vunpack.c.l.b16 %v455
    %v1106 = vunpack.c.h.b16 %v455
    %v1107 = vunpack.c.l.b16 %v456
    %v1108 = vunpack.c.h.b16 %v456
    %v1109 = vpack.c.b16 %v729, %v725
    %v1110 = vpack.c.b16 %v730, %v726
    %v1111 = vpack.c.b16 %v731, %v727
    %v1112 = vpack.c.b16 %v732, %v728
    %v1113 = vpack.c.b16 %v737, %v733
    %v1114 = vpack.c.b16 %v738, %v734
    %v1115 = vpack.c.b16 %v739, %v735
    %v1116 = vpack.c.b16 %v740, %v736
    %v1117 = vpack.c.b16 %v745, %v741
    %v1118 = vpack.c.b16 %v746, %v742
    %v1119 = vpack.c.b16 %v747, %v743
    %v1120 = vpack.c.b16 %v748, %v744
    %v1121 = vpack.c.b16 %v753, %v749
    %v1122 = vpack.c.b16 %v754, %v750
    %v1123 = vpack.c.b16 %v755, %v751
    %v1124 = vpack.c.b16 %v756, %v752
    %v1125 = vpack.c.b16 %v761, %v757
    %v1126 = vpack.c.b16 %v762, %v758
    %v1127 = vpack.c.b16 %v763, %v759
    %v1128 = vpack.c.b16 %v764, %v760
    %v1129 = vpack.c.b16 %v769, %v765
    %v1130 = vpack.c.b16 %v770, %v766
    %v1131 = vpack.c.b16 %v771, %v767
    %v1132 = vpack.c.b16 %v772, %v768
    %v1133 = vpack.c.b16 %v777, %v773
    %v1134 = vpack.c.b16 %v778, %v774
    %v1135 = vpack.c.b16 %v779, %v775
    %v1136 = vpack.c.b16 %v780, %v776
    %v1137 = vpack.c.b16 %v785, %v781
    %v1138 = vpack.c.b16 %v786, %v782
    %v1139 = vpack.c.b16 %v787, %v783
    %v1140 = vpack.c.b16 %v788, %v784
    %v1141 = vpack.c.b16 %v793, %v789
    %v1142 = vpack.c.b16 %v794, %v790
    %v1143 = vpack.c.b16 %v795, %v791
    %v1144 = vpack.c.b16 %v796, %v792
    %v1145 = vpack.c.b16 %v801, %v797
    %v1146 = vpack.c.b16 %v802, %v798
    %v1147 = vpack.c.b16 %v803, %v799
    %v1148 = vpack.c.b16 %v804, %v800
    %v1149 = vpack.c.b16 %v809, %v805
    %v1150 = vpack.c.b16 %v810, %v806
    %v1151 = vpack.c.b16 %v811, %v807
    %v1152 = vpack.c.b16 %v812, %v808
    %v1153 = vpack.c.b16 %v817, %v813
    %v1154 = vpack.c.b16 %v818, %v814
    %v1155 = vpack.c.b16 %v819, %v815
    %v1156 = vpack.c.b16 %v820, %v816
    %v1157 = vpack.c.b16 %v825, %v821
    %v1158 = vpack.c.b16 %v826, %v822
    %v1159 = vpack.c.b16 %v827, %v823
    %v1160 = vpack.c.b16 %v828, %v824
    %v1161 = vpack.c.b16 %v833, %v829
    %v1162 = vpack.c.b16 %v834, %v830
    %v1163 = vpack.c.b16 %v835, %v831
    %v1164 = vpack.c.b16 %v836, %v832
    %v1165 = vpack.c.b16 %v841, %v837
    %v1166 = vpack.c.b16 %v842, %v838
    %v1167 = vpack.c.b16 %v843, %v839
    %v1168 = vpack.c.b16 %v844, %v840
    %v1169 = vpack.c.b16 %v849, %v845
    %v1170 = vpack.c.b16 %v850, %v846
    %v1171 = vpack.c.b16 %v851, %v847
    %v1172 = vpack.c.b16 %v852, %v848
    %v1173 = vpack.c.b16 %v857, %v853
    %v1174 = vpack.c.b16 %v858, %v854
    %v1175 = vpack.c.b16 %v859, %v855
    %v1176 = vpack.c.b16 %v860, %v856
    %v1177 = vpack.c.b16 %v865, %v861
    %v1178 = vpack.c.b16 %v866, %v862
    %v1179 = vpack.c.b16 %v867, %v863
    %v1180 = vpack.c.b16 %v868, %v864
    %v1181 = vpack.c.b16 %v873, %v869
    %v1182 = vpack.c.b16 %v874, %v870
    %v1183 = vpack.c.b16 %v875, %v871
    %v1184 = vpack.c.b16 %v876, %v872
    %v1185 = vpack.c.b16 %v881, %v877
    %v1186 = vpack.c.b16 %v882, %v878
    %v1187 = vpack.c.b16 %v883, %v879
    %v1188 = vpack.c.b16 %v884, %v880
    %v1189 = vpack.c.b16 %v889, %v885
    %v1190 = vpack.c.b16 %v890, %v886
    %v1191 = vpack.c.b16 %v891, %v887
    %v1192 = vpack.c.b16 %v892, %v888
    %v1193 = vpack.c.b16 %v897, %v893
    %v1194 = vpack.c.b16 %v898, %v894
    %v1195 = vpack.c.b16 %v899, %v895
    %v1196 = vpack.c.b16 %v900, %v896
    %v1197 = vpack.c.b16 %v905, %v901
    %v1198 = vpack.c.b16 %v906, %v902
    %v1199 = vpack.c.b16 %v907, %v903
    %v1200 = vpack.c.b16 %v908, %v904
    %v1201 = vpack.c.b16 %v913, %v909
    %v1202 = vpack.c.b16 %v914, %v910
    %v1203 = vpack.c.b16 %v915, %v911
    %v1204 = vpack.c.b16 %v916, %v912
    %v1205 = vpack.c.b16 %v921, %v917
    %v1206 = vpack.c.b16 %v922, %v918
    %v1207 = vpack.c.b16 %v923, %v919
    %v1208 = vpack.c.b16 %v924, %v920
    %v1209 = vpack.c.b16 %v929, %v925
    %v1210 = vpack.c.b16 %v930, %v926
    %v1211 = vpack.c.b16 %v931, %v927
    %v1212 = vpack.c.b16 %v932, %v928
    %v1213 = vpack.c.b16 %v937, %v933
    %v1214 = vpack.c.b16 %v938, %v934
    %v1215 = vpack.c.b16 %v939, %v935
    %v1216 = vpack.c.b16 %v940, %v936
    %v1217 = vpack.c.b16 %v945, %v941
    %v1218 = vpack.c.b16 %v946, %v942
    %v1219 = vpack.c.b16 %v947, %v943
    %v1220 = vpack.c.b16 %v948, %v944
    %v1221 = vpack.c.b16 %v953, %v949
    %v1222 = vpack.c.b16 %v954, %v950
    %v1223 = vpack.c.b16 %v955, %v951
    %v1224 = vpack.c.b16 %v956, %v952
    %v1225 = vpack.c.b16 %v961, %v957
    %v1226 = vpack.c.b16 %v962, %v958
    %v1227 = vpack.c.b16 %v963, %v959
    %v1228 = vpack.c.b16 %v964, %v960
    %v1229 = vpack.c.b16 %v969, %v965
    %v1230 = vpack.c.b16 %v970, %v966
    %v1231 = vpack.c.b16 %v971, %v967
    %v1232 = vpack.c.b16 %v972, %v968
    %v1233 = vpack.c.b16 %v977, %v973
    %v1234 = vpack.c.b16 %v978, %v974
    %v1235 = vpack.c.b16 %v979, %v975
    %v1236 = vpack.c.b16 %v980, %v976
    %v1237 = vpack.c.b16 %v985, %v981
    %v1238 = vpack.c.b16 %v986, %v982
    %v1239 = vpack.c.b16 %v987, %v983
    %v1240 = vpack.c.b16 %v988, %v984
    %v1241 = vpack.c.b16 %v993, %v989
    %v1242 = vpack.c.b16 %v994, %v990
    %v1243 = vpack.c.b16 %v995, %v991
    %v1244 = vpack.c.b16 %v996, %v992
    %v1245 = vpack.c.b16 %v1001, %v997
    %v1246 = vpack.c.b16 %v1002, %v998
    %v1247 = vpack.c.b16 %v1003, %v999
    %v1248 = vpack.c.b16 %v1004, %v1000
    %v1249 = vpack.c.b16 %v1009, %v1005
    %v1250 = vpack.c.b16 %v1010, %v1006
    %v1251 = vpack.c.b16 %v1011, %v1007
    %v1252 = vpack.c.b16 %v1012, %v1008
    %v1253 = vpack.c.b16 %v1017, %v1013
    %v1254 = vpack.c.b16 %v1018, %v1014
    %v1255 = vpack.c.b16 %v1019, %v1015
    %v1256 = vpack.c.b16 %v1020, %v1016
    %v1257 = vpack.c.b16 %v1025, %v1021
    %v1258 = vpack.c.b16 %v1026, %v1022
    %v1259 = vpack.c.b16 %v1027, %v1023
    %v1260 = vpack.c.b16 %v1028, %v1024
    %v1261 = vpack.c.b16 %v1033, %v1029
    %v1262 = vpack.c.b16 %v1034, %v1030
    %v1263 = vpack.c.b16 %v1035, %v1031
    %v1264 = vpack.c.b16 %v1036, %v1032
    %v1265 = vpack.c.b16 %v1041, %v1037
    %v1266 = vpack.c.b16 %v1042, %v1038
    %v1267 = vpack.c.b16 %v1043, %v1039
    %v1268 = vpack.c.b16 %v1044, %v1040
    %v1269 = vpack.c.b16 %v1049, %v1045
    %v1270 = vpack.c.b16 %v1050, %v1046
    %v1271 = vpack.c.b16 %v1051, %v1047
    %v1272 = vpack.c.b16 %v1052, %v1048
    %v1273 = vpack.c.b16 %v1057, %v1053
    %v1274 = vpack.c.b16 %v1058, %v1054
    %v1275 = vpack.c.b16 %v1059, %v1055
    %v1276 = vpack.c.b16 %v1060, %v1056
    %v1277 = vpack.c.b16 %v1065, %v1061
    %v1278 = vpack.c.b16 %v1066, %v1062
    %v1279 = vpack.c.b16 %v1067, %v1063
    %v1280 = vpack.c.b16 %v1068, %v1064
    %v1281 = vpack.c.b16 %v1073, %v1069
    %v1282 = vpack.c.b16 %v1074, %v1070
    %v1283 = vpack.c.b16 %v1075, %v1071
    %v1284 = vpack.c.b16 %v1076, %v1072
    %v1285 = vpack.c.b16 %v1081, %v1077
    %v1286 = vpack.c.b16 %v1082, %v1078
    %v1287 = vpack.c.b16 %v1083, %v1079
    %v1288 = vpack.c.b16 %v1084, %v1080
    %v1289 = vpack.c.b16 %v1089, %v1085
    %v1290 = vpack.c.b16 %v1090, %v1086
    %v1291 = vpack.c.b16 %v1091, %v1087
    %v1292 = vpack.c.b16 %v1092, %v1088
    %v1293 = vpack.c.b16 %v1097, %v1093
    %v1294 = vpack.c.b16 %v1098, %v1094
    %v1295 = vpack.c.b16 %v1099, %v1095
    %v1296 = vpack.c.b16 %v1100, %v1096
    %v1297 = vpack.c.b16 %v1105, %v1101
    %v1298 = vpack.c.b16 %v1106, %v1102
    %v1299 = vpack.c.b16 %v1107, %v1103
    %v1300 = vpack.c.b16 %v1108, %v1104
    %1493 = vmatprep.subr.bf16.mxu0 %v1138
    %1494 = vmatpush1.bf16.msra.mxu0 %v1137
    %1495 = vmatprep.subr.bf16.mxu0 %v1134
    %1496 = vmatpush1.bf16.msra.mxu0 %v1133
    %1497 = vmatprep.subr.bf16.mxu0 %v1130
    %1498 = vmatpush1.bf16.msra.mxu0 %v1129
    %1499 = vmatprep.subr.bf16.mxu0 %v1126
    %1500 = vmatpush1.bf16.msra.mxu0 %v1125
    %1501 = vmatprep.subr.bf16.mxu0 %v1122
    %1502 = vmatpush1.bf16.msra.mxu0 %v1121
    %1503 = vmatprep.subr.bf16.mxu0 %v1118
    %1504 = vmatpush1.bf16.msra.mxu0 %v1117
    %1505 = vmatprep.subr.bf16.mxu0 %v1114
    %1506 = vmatpush1.bf16.msra.mxu0 %v1113
    %1507 = vmatprep.subr.bf16.mxu0 %v1110
    %1508 = vmatpush1.bf16.msra.mxu0 %v1109
    %1509 = vmatprep.subr.bf16.mxu0 %v1170
    %1510 = vmatpush2.bf16.msra.mxu0 %v1169
    %1511 = vmatprep.subr.bf16.mxu0 %v1166
    %1512 = vmatpush2.bf16.msra.mxu0 %v1165
    %1513 = vmatprep.subr.bf16.mxu0 %v1162
    %1514 = vmatpush2.bf16.msra.mxu0 %v1161
    %1515 = vmatprep.subr.bf16.mxu0 %v1158
    %1516 = vmatpush2.bf16.msra.mxu0 %v1157
    %1517 = vmatprep.subr.bf16.mxu0 %v1154
    %1518 = vmatpush2.bf16.msra.mxu0 %v1153
    %1519 = vmatprep.subr.bf16.mxu0 %v1150
    %1520 = vmatpush2.bf16.msra.mxu0 %v1149
    %1521 = vmatprep.subr.bf16.mxu0 %v1146
    %1522 = vmatpush2.bf16.msra.mxu0 %v1145
    %1523 = vmatprep.subr.bf16.mxu0 %v1142
    %1524 = vmatpush2.bf16.msra.mxu0 %v1141
    %1525 = vmatprep.mubr.bf16.mxu0 %v517
    %1526 = vmatmul.mubr.bf16.gmra.mxu0 %v503
    %v1527 = vpop.f32.mrf.mxu0
    %v1528 = vadd.f32 %v462, %v1527
    %v1529 = vpop.f32.mrf.mxu0
    %v1530 = vadd.f32 %v466, %v1529
    %v1531 = vpop.f32.mrf.mxu0
    %v1532 = vpop.f32.mrf.mxu0
    %1533 = vdwg.mxu0
    %1534 = vmatprep.subr.bf16.mxu0 %v1202
    %1535 = vmatpush1.bf16.msra.mxu0 %v1201
    %1536 = vmatprep.subr.bf16.mxu0 %v1198
    %1537 = vmatpush1.bf16.msra.mxu0 %v1197
    %1538 = vmatprep.subr.bf16.mxu0 %v1194
    %1539 = vmatpush1.bf16.msra.mxu0 %v1193
    %1540 = vmatprep.subr.bf16.mxu0 %v1190
    %1541 = vmatpush1.bf16.msra.mxu0 %v1189
    %1542 = vmatprep.subr.bf16.mxu0 %v1186
    %1543 = vmatpush1.bf16.msra.mxu0 %v1185
    %1544 = vmatprep.subr.bf16.mxu0 %v1182
    %1545 = vmatpush1.bf16.msra.mxu0 %v1181
    %1546 = vmatprep.subr.bf16.mxu0 %v1178
    %1547 = vmatpush1.bf16.msra.mxu0 %v1177
    %1548 = vmatprep.subr.bf16.mxu0 %v1174
    %1549 = vmatpush1.bf16.msra.mxu0 %v1173
    %1550 = vmatprep.subr.bf16.mxu0 %v1234
    %1551 = vmatpush2.bf16.msra.mxu0 %v1233
    %1552 = vmatprep.subr.bf16.mxu0 %v1230
    %1553 = vmatpush2.bf16.msra.mxu0 %v1229
    %1554 = vmatprep.subr.bf16.mxu0 %v1226
    %1555 = vmatpush2.bf16.msra.mxu0 %v1225
    %1556 = vmatprep.subr.bf16.mxu0 %v1222
    %1557 = vmatpush2.bf16.msra.mxu0 %v1221
    %1558 = vmatprep.subr.bf16.mxu0 %v1218
    %1559 = vmatpush2.bf16.msra.mxu0 %v1217
    %1560 = vmatprep.subr.bf16.mxu0 %v1214
    %1561 = vmatpush2.bf16.msra.mxu0 %v1213
    %1562 = vmatprep.subr.bf16.mxu0 %v1210
    %1563 = vmatpush2.bf16.msra.mxu0 %v1209
    %1564 = vmatprep.subr.bf16.mxu0 %v1206
    %1565 = vmatpush2.bf16.msra.mxu0 %v1205
    %1566 = vmatprep.mubr.bf16.mxu0 %v526
    %1567 = vmatmul.mubr.bf16.gmra.mxu0 %v525
    %v1568 = vpop.f32.mrf.mxu0
    %v1569 = vadd.f32 %v1528, %v1568
    %v1570 = vpop.f32.mrf.mxu0
    %v1571 = vadd.f32 %v1530, %v1570
    %v1572 = vpop.f32.mrf.mxu0
    %v1573 = vpop.f32.mrf.mxu0
    %1574 = vdwg.mxu0
    %1575 = vmatprep.subr.bf16.mxu0 %v1266
    %1576 = vmatpush1.bf16.msra.mxu0 %v1265
    %1577 = vmatprep.subr.bf16.mxu0 %v1262
    %1578 = vmatpush1.bf16.msra.mxu0 %v1261
    %1579 = vmatprep.subr.bf16.mxu0 %v1258
    %1580 = vmatpush1.bf16.msra.mxu0 %v1257
    %1581 = vmatprep.subr.bf16.mxu0 %v1254
    %1582 = vmatpush1.bf16.msra.mxu0 %v1253
    %1583 = vmatprep.subr.bf16.mxu0 %v1250
    %1584 = vmatpush1.bf16.msra.mxu0 %v1249
    %1585 = vmatprep.subr.bf16.mxu0 %v1246
    %1586 = vmatpush1.bf16.msra.mxu0 %v1245
    %1587 = vmatprep.subr.bf16.mxu0 %v1242
    %1588 = vmatpush1.bf16.msra.mxu0 %v1241
    %1589 = vmatprep.subr.bf16.mxu0 %v1238
    %1590 = vmatpush1.bf16.msra.mxu0 %v1237
    %1591 = vmatprep.subr.bf16.mxu0 %v1298
    %1592 = vmatpush2.bf16.msra.mxu0 %v1297
    %1593 = vmatprep.subr.bf16.mxu0 %v1294
    %1594 = vmatpush2.bf16.msra.mxu0 %v1293
    %1595 = vmatprep.subr.bf16.mxu0 %v1290
    %1596 = vmatpush2.bf16.msra.mxu0 %v1289
    %1597 = vmatprep.subr.bf16.mxu0 %v1286
    %1598 = vmatpush2.bf16.msra.mxu0 %v1285
    %1599 = vmatprep.subr.bf16.mxu0 %v1282
    %1600 = vmatpush2.bf16.msra.mxu0 %v1281
    %1601 = vmatprep.subr.bf16.mxu0 %v1278
    %1602 = vmatpush2.bf16.msra.mxu0 %v1277
    %1603 = vmatprep.subr.bf16.mxu0 %v1274
    %1604 = vmatpush2.bf16.msra.mxu0 %v1273
    %1605 = vmatprep.subr.bf16.mxu0 %v1270
    %1606 = vmatpush2.bf16.msra.mxu0 %v1269
    %1607 = vmatprep.mubr.bf16.mxu0 %v524
    %1608 = vmatmul.mubr.bf16.gmra.mxu0 %v510
    %v1609 = vpop.f32.mrf.mxu0
    %v1610 = vadd.f32 %v1569, %v1609
    %v1611 = vpop.f32.mrf.mxu0
    %v1612 = vadd.f32 %v1571, %v1611
    %v1613 = vpop.f32.mrf.mxu0
    %v1614 = vpop.f32.mrf.mxu0
    %1615 = vdwg.mxu0
    %1616 = vmatprep.subr.bf16.mxu0 %v1140
    %1617 = vmatpush1.bf16.msra.mxu0 %v1139
    %1618 = vmatprep.subr.bf16.mxu0 %v1136
    %1619 = vmatpush1.bf16.msra.mxu0 %v1135
    %1620 = vmatprep.subr.bf16.mxu0 %v1132
    %1621 = vmatpush1.bf16.msra.mxu0 %v1131
    %1622 = vmatprep.subr.bf16.mxu0 %v1128
    %1623 = vmatpush1.bf16.msra.mxu0 %v1127
    %1624 = vmatprep.subr.bf16.mxu0 %v1124
    %1625 = vmatpush1.bf16.msra.mxu0 %v1123
    %1626 = vmatprep.subr.bf16.mxu0 %v1120
    %1627 = vmatpush1.bf16.msra.mxu0 %v1119
    %1628 = vmatprep.subr.bf16.mxu0 %v1116
    %1629 = vmatpush1.bf16.msra.mxu0 %v1115
    %1630 = vmatprep.subr.bf16.mxu0 %v1112
    %1631 = vmatpush1.bf16.msra.mxu0 %v1111
    %1632 = vmatprep.subr.bf16.mxu0 %v1172
    %1633 = vmatpush2.bf16.msra.mxu0 %v1171
    %1634 = vmatprep.subr.bf16.mxu0 %v1168
    %1635 = vmatpush2.bf16.msra.mxu0 %v1167
    %1636 = vmatprep.subr.bf16.mxu0 %v1164
    %1637 = vmatpush2.bf16.msra.mxu0 %v1163
    %1638 = vmatprep.subr.bf16.mxu0 %v1160
    %1639 = vmatpush2.bf16.msra.mxu0 %v1159
    %1640 = vmatprep.subr.bf16.mxu0 %v1156
    %1641 = vmatpush2.bf16.msra.mxu0 %v1155
    %1642 = vmatprep.subr.bf16.mxu0 %v1152
    %1643 = vmatpush2.bf16.msra.mxu0 %v1151
    %1644 = vmatprep.subr.bf16.mxu0 %v1148
    %1645 = vmatpush2.bf16.msra.mxu0 %v1147
    %1646 = vmatprep.subr.bf16.mxu0 %v1144
    %1647 = vmatpush2.bf16.msra.mxu0 %v1143
    %1648 = vmatprep.mubr.bf16.mxu0 %v517
    %1649 = vmatmul.mubr.bf16.gmra.mxu0 %v503
    %v1650 = vpop.f32.mrf.mxu0
    %v1651 = vadd.f32 %v470, %v1650
    %v1652 = vpop.f32.mrf.mxu0
    %v1653 = vadd.f32 %v474, %v1652
    %v1654 = vpop.f32.mrf.mxu0
    %v1655 = vpop.f32.mrf.mxu0
    %1656 = vdwg.mxu0
    %1657 = vmatprep.subr.bf16.mxu0 %v1204
    %1658 = vmatpush1.bf16.msra.mxu0 %v1203
    %1659 = vmatprep.subr.bf16.mxu0 %v1200
    %1660 = vmatpush1.bf16.msra.mxu0 %v1199
    %1661 = vmatprep.subr.bf16.mxu0 %v1196
    %1662 = vmatpush1.bf16.msra.mxu0 %v1195
    %1663 = vmatprep.subr.bf16.mxu0 %v1192
    %1664 = vmatpush1.bf16.msra.mxu0 %v1191
    %1665 = vmatprep.subr.bf16.mxu0 %v1188
    %1666 = vmatpush1.bf16.msra.mxu0 %v1187
    %1667 = vmatprep.subr.bf16.mxu0 %v1184
    %1668 = vmatpush1.bf16.msra.mxu0 %v1183
    %1669 = vmatprep.subr.bf16.mxu0 %v1180
    %1670 = vmatpush1.bf16.msra.mxu0 %v1179
    %1671 = vmatprep.subr.bf16.mxu0 %v1176
    %1672 = vmatpush1.bf16.msra.mxu0 %v1175
    %1673 = vmatprep.subr.bf16.mxu0 %v1236
    %1674 = vmatpush2.bf16.msra.mxu0 %v1235
    %1675 = vmatprep.subr.bf16.mxu0 %v1232
    %1676 = vmatpush2.bf16.msra.mxu0 %v1231
    %1677 = vmatprep.subr.bf16.mxu0 %v1228
    %1678 = vmatpush2.bf16.msra.mxu0 %v1227
    %1679 = vmatprep.subr.bf16.mxu0 %v1224
    %1680 = vmatpush2.bf16.msra.mxu0 %v1223
    %1681 = vmatprep.subr.bf16.mxu0 %v1220
    %1682 = vmatpush2.bf16.msra.mxu0 %v1219
    %1683 = vmatprep.subr.bf16.mxu0 %v1216
    %1684 = vmatpush2.bf16.msra.mxu0 %v1215
    %1685 = vmatprep.subr.bf16.mxu0 %v1212
    %1686 = vmatpush2.bf16.msra.mxu0 %v1211
    %1687 = vmatprep.subr.bf16.mxu0 %v1208
    %1688 = vmatpush2.bf16.msra.mxu0 %v1207
    %1689 = vmatprep.mubr.bf16.mxu0 %v526
    %1690 = vmatmul.mubr.bf16.gmra.mxu0 %v525
    %v1691 = vpop.f32.mrf.mxu0
    %v1692 = vadd.f32 %v1651, %v1691
    %v1693 = vpop.f32.mrf.mxu0
    %v1694 = vadd.f32 %v1653, %v1693
    %v1695 = vpop.f32.mrf.mxu0
    %v1696 = vpop.f32.mrf.mxu0
    %1697 = vdwg.mxu0
    %1698 = vmatprep.subr.bf16.mxu0 %v1268
    %1699 = vmatpush1.bf16.msra.mxu0 %v1267
    %1700 = vmatprep.subr.bf16.mxu0 %v1264
    %1701 = vmatpush1.bf16.msra.mxu0 %v1263
    %1702 = vmatprep.subr.bf16.mxu0 %v1260
    %1703 = vmatpush1.bf16.msra.mxu0 %v1259
    %1704 = vmatprep.subr.bf16.mxu0 %v1256
    %1705 = vmatpush1.bf16.msra.mxu0 %v1255
    %1706 = vmatprep.subr.bf16.mxu0 %v1252
    %1707 = vmatpush1.bf16.msra.mxu0 %v1251
    %1708 = vmatprep.subr.bf16.mxu0 %v1248
    %1709 = vmatpush1.bf16.msra.mxu0 %v1247
    %1710 = vmatprep.subr.bf16.mxu0 %v1244
    %1711 = vmatpush1.bf16.msra.mxu0 %v1243
    %1712 = vmatprep.subr.bf16.mxu0 %v1240
    %1713 = vmatpush1.bf16.msra.mxu0 %v1239
    %1714 = vmatprep.subr.bf16.mxu0 %v1300
    %1715 = vmatpush2.bf16.msra.mxu0 %v1299
    %1716 = vmatprep.subr.bf16.mxu0 %v1296
    %1717 = vmatpush2.bf16.msra.mxu0 %v1295
    %1718 = vmatprep.subr.bf16.mxu0 %v1292
    %1719 = vmatpush2.bf16.msra.mxu0 %v1291
    %1720 = vmatprep.subr.bf16.mxu0 %v1288
    %1721 = vmatpush2.bf16.msra.mxu0 %v1287
    %1722 = vmatprep.subr.bf16.mxu0 %v1284
    %1723 = vmatpush2.bf16.msra.mxu0 %v1283
    %1724 = vmatprep.subr.bf16.mxu0 %v1280
    %1725 = vmatpush2.bf16.msra.mxu0 %v1279
    %1726 = vmatprep.subr.bf16.mxu0 %v1276
    %1727 = vmatpush2.bf16.msra.mxu0 %v1275
    %1728 = vmatprep.subr.bf16.mxu0 %v1272
    %1729 = vmatpush2.bf16.msra.mxu0 %v1271
    %1730 = vmatprep.mubr.bf16.mxu0 %v524
    %1731 = vmatmul.mubr.bf16.gmra.mxu0 %v510
    %v1732 = vpop.f32.mrf.mxu0
    %v1733 = vadd.f32 %v1692, %v1732
    %v1734 = vpop.f32.mrf.mxu0
    %v1735 = vadd.f32 %v1694, %v1734
    %v1736 = vpop.f32.mrf.mxu0
    %v1737 = vpop.f32.mrf.mxu0
    %1738 = vdwg.mxu0
    %v1739 = vmax.f32 %v1610, 0.0
    %v1740 = vmax.f32 %v1612, 0.0
    %v1741 = vmax.f32 %v1733, 0.0
    %v1742 = vmax.f32 %v1735, 0.0
    %v1743 = vpack.c.bf16 %v1739, %v1739
    %v1744 = vpack.c.bf16 %v1740, %v1740
    %v1745 = vpack.c.bf16 %v1741, %v1741
    %v1746 = vpack.c.bf16 %v1742, %v1742
    %v1747 = vld [vmem:[#allocation10] sm:$0xf]
    %v1748 = vld [vmem:[#allocation10 + $0x4] sm:$0xf]
    %v1749 = vld [vmem:[#allocation10 + $0x8] sm:$0xf]
    %v1750 = vld [vmem:[#allocation10 + $0xc] sm:$0xf]
    %v1751 = vld [vmem:[#allocation10 + $0x10] sm:$0xf]
    %v1752 = vld [vmem:[#allocation10 + $0x14] sm:$0xf]
    %v1753 = vld [vmem:[#allocation10 + $0x18] sm:$0xf]
    %v1754 = vld [vmem:[#allocation10 + $0x1c] sm:$0xf]
    %v1755 = vld [vmem:[#allocation10 + $0x20] sm:$0xf]
    %v1756 = vld [vmem:[#allocation10 + $0x24] sm:$0xf]
    %v1757 = vld [vmem:[#allocation10 + $0x28] sm:$0xf]
    %v1758 = vld [vmem:[#allocation10 + $0x2c] sm:$0xf]
    %v1759 = vld [vmem:[#allocation10 + $0x30] sm:$0xf]
    %v1760 = vld [vmem:[#allocation10 + $0x34] sm:$0xf]
    %v1761 = vld [vmem:[#allocation10 + $0x38] sm:$0xf]
    %v1762 = vld [vmem:[#allocation10 + $0x3c] sm:$0xf]
    %v1763 = vld [vmem:[#allocation10 + $0x40] sm:$0xf]
    %v1764 = vld [vmem:[#allocation10 + $0x44] sm:$0xf]
    %v1765 = vld [vmem:[#allocation10 + $0x48] sm:$0xf]
    %v1766 = vld [vmem:[#allocation10 + $0x4c] sm:$0xf]
    %v1767 = vld [vmem:[#allocation10 + $0x50] sm:$0xf]
    %v1768 = vld [vmem:[#allocation10 + $0x54] sm:$0xf]
    %v1769 = vld [vmem:[#allocation10 + $0x58] sm:$0xf]
    %v1770 = vld [vmem:[#allocation10 + $0x5c] sm:$0xf]
    %v1771 = vld [vmem:[#allocation10 + $0x60] sm:$0xf]
    %v1772 = vld [vmem:[#allocation10 + $0x64] sm:$0xf]
    %v1773 = vld [vmem:[#allocation10 + $0x68] sm:$0xf]
    %v1774 = vld [vmem:[#allocation10 + $0x6c] sm:$0xf]
    %v1775 = vld [vmem:[#allocation10 + $0x70] sm:$0xf]
    %v1776 = vld [vmem:[#allocation10 + $0x74] sm:$0xf]
    %v1777 = vld [vmem:[#allocation10 + $0x78] sm:$0xf]
    %v1778 = vld [vmem:[#allocation10 + $0x7c] sm:$0xf]
    %v1779 = vld [vmem:[#allocation10 + $0x80] sm:$0xf]
    %v1780 = vld [vmem:[#allocation10 + $0x84] sm:$0xf]
    %v1781 = vld [vmem:[#allocation10 + $0x88] sm:$0xf]
    %v1782 = vld [vmem:[#allocation10 + $0x8c] sm:$0xf]
    %v1783 = vld [vmem:[#allocation10 + $0x90] sm:$0xf]
    %v1784 = vld [vmem:[#allocation10 + $0x94] sm:$0xf]
    %v1785 = vld [vmem:[#allocation10 + $0x98] sm:$0xf]
    %v1786 = vld [vmem:[#allocation10 + $0x9c] sm:$0xf]
    %v1787 = vld [vmem:[#allocation10 + $0xa0] sm:$0xf]
    %v1788 = vld [vmem:[#allocation10 + $0xa4] sm:$0xf]
    %v1789 = vld [vmem:[#allocation10 + $0xa8] sm:$0xf]
    %v1790 = vld [vmem:[#allocation10 + $0xac] sm:$0xf]
    %v1791 = vld [vmem:[#allocation10 + $0xb0] sm:$0xf]
    %v1792 = vld [vmem:[#allocation10 + $0xb4] sm:$0xf]
    %v1793 = vld [vmem:[#allocation10 + $0xb8] sm:$0xf]
    %v1794 = vld [vmem:[#allocation10 + $0xbc] sm:$0xf]
    %v1795 = vld [vmem:[#allocation10 + $0xc0] sm:$0xf]
    %v1796 = vld [vmem:[#allocation10 + $0xc4] sm:$0xf]
    %v1797 = vld [vmem:[#allocation10 + $0xc8] sm:$0xf]
    %v1798 = vld [vmem:[#allocation10 + $0xcc] sm:$0xf]
    %v1799 = vld [vmem:[#allocation10 + $0xd0] sm:$0xf]
    %v1800 = vld [vmem:[#allocation10 + $0xd4] sm:$0xf]
    %v1801 = vld [vmem:[#allocation10 + $0xd8] sm:$0xf]
    %v1802 = vld [vmem:[#allocation10 + $0xdc] sm:$0xf]
    %v1803 = vld [vmem:[#allocation10 + $0xe0] sm:$0xf]
    %v1804 = vld [vmem:[#allocation10 + $0xe4] sm:$0xf]
    %v1805 = vld [vmem:[#allocation10 + $0xe8] sm:$0xf]
    %v1806 = vld [vmem:[#allocation10 + $0xec] sm:$0xf]
    %v1807 = vld [vmem:[#allocation10 + $0xf0] sm:$0xf]
    %v1808 = vld [vmem:[#allocation10 + $0xf4] sm:$0xf]
    %v1809 = vld [vmem:[#allocation10 + $0xf8] sm:$0xf]
    %v1810 = vld [vmem:[#allocation10 + $0xfc] sm:$0xf]
    %v1811 = vld [vmem:[%s7] sm:$0x1]
    %v1813 = vlaneseq
    %v1814 = vshrl.u32 %v1813, 7
    %v1815 = vsub.s32 0, %v1814
    %v1816 = vrot.slane %v1811, %v1815
    %v1882 = vunpack.c.l.b16 %v1747
    %v1883 = vunpack.c.l.b16 %v1748
    %v1884 = vunpack.c.l.b16 %v1749
    %v1885 = vunpack.c.l.b16 %v1750
    %v1886 = vunpack.c.l.b16 %v1751
    %v1887 = vunpack.c.l.b16 %v1752
    %v1888 = vunpack.c.l.b16 %v1753
    %v1889 = vunpack.c.l.b16 %v1754
    %v1890 = vunpack.c.l.b16 %v1755
    %v1891 = vunpack.c.l.b16 %v1756
    %v1892 = vunpack.c.l.b16 %v1757
    %v1893 = vunpack.c.l.b16 %v1758
    %v1894 = vunpack.c.l.b16 %v1759
    %v1895 = vunpack.c.l.b16 %v1760
    %v1896 = vunpack.c.l.b16 %v1761
    %v1897 = vunpack.c.l.b16 %v1762
    %v1898 = vunpack.c.l.b16 %v1763
    %v1899 = vunpack.c.l.b16 %v1764
    %v1900 = vunpack.c.l.b16 %v1765
    %v1901 = vunpack.c.l.b16 %v1766
    %v1902 = vunpack.c.l.b16 %v1767
    %v1903 = vunpack.c.l.b16 %v1768
    %v1904 = vunpack.c.l.b16 %v1769
    %v1905 = vunpack.c.l.b16 %v1770
    %v1906 = vunpack.c.l.b16 %v1771
    %v1907 = vunpack.c.l.b16 %v1772
    %v1908 = vunpack.c.l.b16 %v1773
    %v1909 = vunpack.c.l.b16 %v1774
    %v1910 = vunpack.c.l.b16 %v1775
    %v1911 = vunpack.c.l.b16 %v1776
    %v1912 = vunpack.c.l.b16 %v1777
    %v1913 = vunpack.c.l.b16 %v1778
    %v1914 = vunpack.c.l.b16 %v1779
    %v1915 = vunpack.c.l.b16 %v1780
    %v1916 = vunpack.c.l.b16 %v1781
    %v1917 = vunpack.c.l.b16 %v1782
    %v1918 = vunpack.c.l.b16 %v1783
    %v1919 = vunpack.c.l.b16 %v1784
    %v1920 = vunpack.c.l.b16 %v1785
    %v1921 = vunpack.c.l.b16 %v1786
    %v1922 = vunpack.c.l.b16 %v1787
    %v1923 = vunpack.c.l.b16 %v1788
    %v1924 = vunpack.c.l.b16 %v1789
    %v1925 = vunpack.c.l.b16 %v1790
    %v1926 = vunpack.c.l.b16 %v1791
    %v1927 = vunpack.c.l.b16 %v1792
    %v1928 = vunpack.c.l.b16 %v1793
    %v1929 = vunpack.c.l.b16 %v1794
    %v1930 = vunpack.c.l.b16 %v1795
    %v1931 = vunpack.c.l.b16 %v1796
    %v1932 = vunpack.c.l.b16 %v1797
    %v1933 = vunpack.c.l.b16 %v1798
    %v1934 = vunpack.c.l.b16 %v1799
    %v1935 = vunpack.c.l.b16 %v1800
    %v1936 = vunpack.c.l.b16 %v1801
    %v1937 = vunpack.c.l.b16 %v1802
    %v1938 = vunpack.c.l.b16 %v1803
    %v1939 = vunpack.c.l.b16 %v1804
    %v1940 = vunpack.c.l.b16 %v1805
    %v1941 = vunpack.c.l.b16 %v1806
    %v1942 = vunpack.c.l.b16 %v1807
    %v1943 = vunpack.c.l.b16 %v1808
    %v1944 = vunpack.c.l.b16 %v1809
    %v1945 = vunpack.c.l.b16 %v1810
    %v1946 = vpack.c.b16 %v1883, %v1882
    %v1947 = vpack.c.b16 %v1885, %v1884
    %v1948 = vpack.c.b16 %v1887, %v1886
    %v1949 = vpack.c.b16 %v1889, %v1888
    %v1950 = vpack.c.b16 %v1891, %v1890
    %v1951 = vpack.c.b16 %v1893, %v1892
    %v1952 = vpack.c.b16 %v1895, %v1894
    %v1953 = vpack.c.b16 %v1897, %v1896
    %v1954 = vpack.c.b16 %v1899, %v1898
    %v1955 = vpack.c.b16 %v1901, %v1900
    %v1956 = vpack.c.b16 %v1903, %v1902
    %v1957 = vpack.c.b16 %v1905, %v1904
    %v1958 = vpack.c.b16 %v1907, %v1906
    %v1959 = vpack.c.b16 %v1909, %v1908
    %v1960 = vpack.c.b16 %v1911, %v1910
    %v1961 = vpack.c.b16 %v1913, %v1912
    %v1962 = vpack.c.b16 %v1915, %v1914
    %v1963 = vpack.c.b16 %v1917, %v1916
    %v1964 = vpack.c.b16 %v1919, %v1918
    %v1965 = vpack.c.b16 %v1921, %v1920
    %v1966 = vpack.c.b16 %v1923, %v1922
    %v1967 = vpack.c.b16 %v1925, %v1924
    %v1968 = vpack.c.b16 %v1927, %v1926
    %v1969 = vpack.c.b16 %v1929, %v1928
    %v1970 = vpack.c.b16 %v1931, %v1930
    %v1971 = vpack.c.b16 %v1933, %v1932
    %v1972 = vpack.c.b16 %v1935, %v1934
    %v1973 = vpack.c.b16 %v1937, %v1936
    %v1974 = vpack.c.b16 %v1939, %v1938
    %v1975 = vpack.c.b16 %v1941, %v1940
    %v1976 = vpack.c.b16 %v1943, %v1942
    %v1977 = vpack.c.b16 %v1945, %v1944
    %2010 = vmatprep.subr.bf16.mxu0 0
    %2011 = vmatpush1.bf16.msra.mxu0 %v1953
    %2012 = vmatprep.subr.bf16.mxu0 0
    %2013 = vmatpush1.bf16.msra.mxu0 %v1952
    %2014 = vmatprep.subr.bf16.mxu0 0
    %2015 = vmatpush1.bf16.msra.mxu0 %v1951
    %2016 = vmatprep.subr.bf16.mxu0 0
    %2017 = vmatpush1.bf16.msra.mxu0 %v1950
    %2018 = vmatprep.subr.bf16.mxu0 0
    %2019 = vmatpush1.bf16.msra.mxu0 %v1949
    %2020 = vmatprep.subr.bf16.mxu0 0
    %2021 = vmatpush1.bf16.msra.mxu0 %v1948
    %2022 = vmatprep.subr.bf16.mxu0 0
    %2023 = vmatpush1.bf16.msra.mxu0 %v1947
    %2024 = vmatprep.subr.bf16.mxu0 0
    %2025 = vmatpush1.bf16.msra.mxu0 %v1946
    %2026 = vmatprep.subr.bf16.mxu0 0
    %2027 = vmatpush2.bf16.msra.mxu0 %v1961
    %2028 = vmatprep.subr.bf16.mxu0 0
    %2029 = vmatpush2.bf16.msra.mxu0 %v1960
    %2030 = vmatprep.subr.bf16.mxu0 0
    %2031 = vmatpush2.bf16.msra.mxu0 %v1959
    %2032 = vmatprep.subr.bf16.mxu0 0
    %2033 = vmatpush2.bf16.msra.mxu0 %v1958
    %2034 = vmatprep.subr.bf16.mxu0 0
    %2035 = vmatpush2.bf16.msra.mxu0 %v1957
    %2036 = vmatprep.subr.bf16.mxu0 0
    %2037 = vmatpush2.bf16.msra.mxu0 %v1956
    %2038 = vmatprep.subr.bf16.mxu0 0
    %2039 = vmatpush2.bf16.msra.mxu0 %v1955
    %2040 = vmatprep.subr.bf16.mxu0 0
    %2041 = vmatpush2.bf16.msra.mxu0 %v1954
    %2042 = vmatprep.mubr.bf16.mxu0 %v1744
    %2043 = vmatmul.mubr.bf16.gmra.mxu0 %v1743
    %v2044 = vpop.f32.mrf.mxu0
    %v2045 = vadd.f32 %v1816, %v2044
    %v2046 = vpop.f32.mrf.mxu0
    %v2047 = vpop.f32.mrf.mxu0
    %v2048 = vpop.f32.mrf.mxu0
    %2049 = vdwg.mxu0
    %2050 = vmatprep.subr.bf16.mxu0 0
    %2051 = vmatpush1.bf16.msra.mxu0 %v1969
    %2052 = vmatprep.subr.bf16.mxu0 0
    %2053 = vmatpush1.bf16.msra.mxu0 %v1968
    %2054 = vmatprep.subr.bf16.mxu0 0
    %2055 = vmatpush1.bf16.msra.mxu0 %v1967
    %2056 = vmatprep.subr.bf16.mxu0 0
    %2057 = vmatpush1.bf16.msra.mxu0 %v1966
    %2058 = vmatprep.subr.bf16.mxu0 0
    %2059 = vmatpush1.bf16.msra.mxu0 %v1965
    %2060 = vmatprep.subr.bf16.mxu0 0
    %2061 = vmatpush1.bf16.msra.mxu0 %v1964
    %2062 = vmatprep.subr.bf16.mxu0 0
    %2063 = vmatpush1.bf16.msra.mxu0 %v1963
    %2064 = vmatprep.subr.bf16.mxu0 0
    %2065 = vmatpush1.bf16.msra.mxu0 %v1962
    %2066 = vmatprep.subr.bf16.mxu0 0
    %2067 = vmatpush2.bf16.msra.mxu0 %v1977
    %2068 = vmatprep.subr.bf16.mxu0 0
    %2069 = vmatpush2.bf16.msra.mxu0 %v1976
    %2070 = vmatprep.subr.bf16.mxu0 0
    %2071 = vmatpush2.bf16.msra.mxu0 %v1975
    %2072 = vmatprep.subr.bf16.mxu0 0
    %2073 = vmatpush2.bf16.msra.mxu0 %v1974
    %2074 = vmatprep.subr.bf16.mxu0 0
    %2075 = vmatpush2.bf16.msra.mxu0 %v1973
    %2076 = vmatprep.subr.bf16.mxu0 0
    %2077 = vmatpush2.bf16.msra.mxu0 %v1972
    %2078 = vmatprep.subr.bf16.mxu0 0
    %2079 = vmatpush2.bf16.msra.mxu0 %v1971
    %2080 = vmatprep.subr.bf16.mxu0 0
    %2081 = vmatpush2.bf16.msra.mxu0 %v1970
    %2082 = vmatprep.mubr.bf16.mxu0 %v1746
    %2083 = vmatmul.mubr.bf16.gmra.mxu0 %v1745
    %v2084 = vpop.f32.mrf.mxu0
    %v2085 = vadd.f32 %v2045, %v2084
    %v2086 = vpop.f32.mrf.mxu0
    %v2087 = vpop.f32.mrf.mxu0
    %v2088 = vpop.f32.mrf.mxu0
    %2089 = vdwg.mxu0
    %v2090 = vmul.f32 %v263, %v263
    %vm2091 = vcmask 1041408
    %v2092 = vsel %vm2091, %v2090, 0.0
    %2093 = vadd.xlane.f32.xlu0 %v2092
    %v2094 = vpop.xlane.xlu0 %2093
    %v2095 = vmul.f32 %v2085, %v2085
    %v2096 = vsel %vm2091, %v2095, 0.0
    %2097 = vadd.xlane.f32.xlu0 %v2096
    %v2098 = vpop.xlane.xlu0 %2097
    %v2099 = vmul.f32 %v263, %v2085
    %v2100 = vsel %vm2091, %v2099, 0.0
    %2101 = vadd.xlane.f32.xlu0 %v2100
    %v2102 = vpop.xlane.xlu0 %2101
    %v2103 = vmul.f32 %v2094, %v2098
    %v2104 = vadd.f32 %v2103, 1e-12
    %v2105 = vrsqrt.pop %v2104
    %v2106 = vmul.f32 %v2102, %v2105
    %v2107 = vpack.c.bf16 %v263, %v263
    %v2108 = vpack.c.bf16 %v2085, %v2085
    %v2109 = vld [vmem:[#allocation11] sm:$0xf]
    %v2110 = vld [vmem:[#allocation11 + $0x4] sm:$0xf]
    %v2111 = vld [vmem:[#allocation11 + $0x8] sm:$0xf]
    %v2112 = vld [vmem:[#allocation11 + $0xc] sm:$0xf]
    %v2113 = vld [vmem:[#allocation11 + $0x10] sm:$0xf]
    %v2114 = vld [vmem:[#allocation11 + $0x14] sm:$0xf]
    %v2115 = vld [vmem:[#allocation11 + $0x18] sm:$0xf]
    %v2116 = vld [vmem:[#allocation11 + $0x1c] sm:$0xf]
    %v2117 = vld [vmem:[#allocation11 + $0x20] sm:$0xf]
    %v2118 = vld [vmem:[#allocation11 + $0x24] sm:$0xf]
    %v2119 = vld [vmem:[#allocation11 + $0x28] sm:$0xf]
    %v2120 = vld [vmem:[#allocation11 + $0x2c] sm:$0xf]
    %v2121 = vld [vmem:[#allocation11 + $0x30] sm:$0xf]
    %v2122 = vld [vmem:[#allocation11 + $0x34] sm:$0xf]
    %v2123 = vld [vmem:[#allocation11 + $0x38] sm:$0xf]
    %v2124 = vld [vmem:[#allocation11 + $0x3c] sm:$0xf]
    %v2125 = vld [vmem:[#allocation11 + $0x40] sm:$0xf]
    %v2126 = vld [vmem:[#allocation11 + $0x44] sm:$0xf]
    %v2127 = vld [vmem:[#allocation11 + $0x48] sm:$0xf]
    %v2128 = vld [vmem:[#allocation11 + $0x4c] sm:$0xf]
    %v2129 = vld [vmem:[#allocation11 + $0x50] sm:$0xf]
    %v2130 = vld [vmem:[#allocation11 + $0x54] sm:$0xf]
    %v2131 = vld [vmem:[#allocation11 + $0x58] sm:$0xf]
    %v2132 = vld [vmem:[#allocation11 + $0x5c] sm:$0xf]
    %v2133 = vld [vmem:[#allocation11 + $0x60] sm:$0xf]
    %v2134 = vld [vmem:[#allocation11 + $0x64] sm:$0xf]
    %v2135 = vld [vmem:[#allocation11 + $0x68] sm:$0xf]
    %v2136 = vld [vmem:[#allocation11 + $0x6c] sm:$0xf]
    %v2137 = vld [vmem:[#allocation11 + $0x70] sm:$0xf]
    %v2138 = vld [vmem:[#allocation11 + $0x74] sm:$0xf]
    %v2139 = vld [vmem:[#allocation11 + $0x78] sm:$0xf]
    %v2140 = vld [vmem:[#allocation11 + $0x7c] sm:$0xf]
    %v2141 = vld [vmem:[%s9] sm:$0x1]
    %v2143 = vlaneseq
    %v2144 = vshrl.u32 %v2143, 7
    %v2145 = vsub.s32 0, %v2144
    %v2146 = vrot.slane %v2141, %v2145
    %v2180 = vunpack.c.l.b16 %v2109
    %v2181 = vunpack.c.l.b16 %v2110
    %v2182 = vunpack.c.l.b16 %v2111
    %v2183 = vunpack.c.l.b16 %v2112
    %v2184 = vunpack.c.l.b16 %v2113
    %v2185 = vunpack.c.l.b16 %v2114
    %v2186 = vunpack.c.l.b16 %v2115
    %v2187 = vunpack.c.l.b16 %v2116
    %v2188 = vunpack.c.l.b16 %v2117
    %v2189 = vunpack.c.l.b16 %v2118
    %v2190 = vunpack.c.l.b16 %v2119
    %v2191 = vunpack.c.l.b16 %v2120
    %v2192 = vunpack.c.l.b16 %v2121
    %v2193 = vunpack.c.l.b16 %v2122
    %v2194 = vunpack.c.l.b16 %v2123
    %v2195 = vunpack.c.l.b16 %v2124
    %v2196 = vunpack.c.l.b16 %v2125
    %v2197 = vunpack.c.l.b16 %v2126
    %v2198 = vunpack.c.l.b16 %v2127
    %v2199 = vunpack.c.l.b16 %v2128
    %v2200 = vunpack.c.l.b16 %v2129
    %v2201 = vunpack.c.l.b16 %v2130
    %v2202 = vunpack.c.l.b16 %v2131
    %v2203 = vunpack.c.l.b16 %v2132
    %v2204 = vunpack.c.l.b16 %v2133
    %v2205 = vunpack.c.l.b16 %v2134
    %v2206 = vunpack.c.l.b16 %v2135
    %v2207 = vunpack.c.l.b16 %v2136
    %v2208 = vunpack.c.l.b16 %v2137
    %v2209 = vunpack.c.l.b16 %v2138
    %v2210 = vunpack.c.l.b16 %v2139
    %v2211 = vunpack.c.l.b16 %v2140
    %v2212 = vpack.c.b16 %v2181, %v2180
    %v2213 = vpack.c.b16 %v2183, %v2182
    %v2214 = vpack.c.b16 %v2185, %v2184
    %v2215 = vpack.c.b16 %v2187, %v2186
    %v2216 = vpack.c.b16 %v2189, %v2188
    %v2217 = vpack.c.b16 %v2191, %v2190
    %v2218 = vpack.c.b16 %v2193, %v2192
    %v2219 = vpack.c.b16 %v2195, %v2194
    %v2220 = vpack.c.b16 %v2197, %v2196
    %v2221 = vpack.c.b16 %v2199, %v2198
    %v2222 = vpack.c.b16 %v2201, %v2200
    %v2223 = vpack.c.b16 %v2203, %v2202
    %v2224 = vpack.c.b16 %v2205, %v2204
    %v2225 = vpack.c.b16 %v2207, %v2206
    %v2226 = vpack.c.b16 %v2209, %v2208
    %v2227 = vpack.c.b16 %v2211, %v2210
    %2244 = vmatprep.subr.bf16.mxu0 0
    %2245 = vmatpush1.bf16.msra.mxu0 %v2219
    %2246 = vmatprep.subr.bf16.mxu0 0
    %2247 = vmatpush1.bf16.msra.mxu0 %v2218
    %2248 = vmatprep.subr.bf16.mxu0 0
    %2249 = vmatpush1.bf16.msra.mxu0 %v2217
    %2250 = vmatprep.subr.bf16.mxu0 0
    %2251 = vmatpush1.bf16.msra.mxu0 %v2216
    %2252 = vmatprep.subr.bf16.mxu0 0
    %2253 = vmatpush1.bf16.msra.mxu0 %v2215
    %2254 = vmatprep.subr.bf16.mxu0 0
    %2255 = vmatpush1.bf16.msra.mxu0 %v2214
    %2256 = vmatprep.subr.bf16.mxu0 0
    %2257 = vmatpush1.bf16.msra.mxu0 %v2213
    %2258 = vmatprep.subr.bf16.mxu0 0
    %2259 = vmatpush1.bf16.msra.mxu0 %v2212
    %2260 = vmatprep.subr.bf16.mxu0 0
    %2261 = vmatpush2.bf16.msra.mxu0 %v2227
    %2262 = vmatprep.subr.bf16.mxu0 0
    %2263 = vmatpush2.bf16.msra.mxu0 %v2226
    %2264 = vmatprep.subr.bf16.mxu0 0
    %2265 = vmatpush2.bf16.msra.mxu0 %v2225
    %2266 = vmatprep.subr.bf16.mxu0 0
    %2267 = vmatpush2.bf16.msra.mxu0 %v2224
    %2268 = vmatprep.subr.bf16.mxu0 0
    %2269 = vmatpush2.bf16.msra.mxu0 %v2223
    %2270 = vmatprep.subr.bf16.mxu0 0
    %2271 = vmatpush2.bf16.msra.mxu0 %v2222
    %2272 = vmatprep.subr.bf16.mxu0 0
    %2273 = vmatpush2.bf16.msra.mxu0 %v2221
    %2274 = vmatprep.subr.bf16.mxu0 0
    %2275 = vmatpush2.bf16.msra.mxu0 %v2220
    %2276 = vmatprep.mubr.bf16.mxu0 %v2108
    %2277 = vmatmul.mubr.bf16.gmra.mxu0 %v2107
    %v2278 = vpop.f32.mrf.mxu0
    %v2279 = vadd.f32 %v2146, %v2278
    %v2280 = vpop.f32.mrf.mxu0
    %v2281 = vpop.f32.mrf.mxu0
    %v2282 = vpop.f32.mrf.mxu0
    %2283 = vdwg.mxu0
    %v2284 = vadd.f32 %v2279, %v2106
    %2285 = vst [vmem:[#allocation13] sm:$0x3] %v2284
    // Predicated region
    $region66: #{tpu_custom_call.1} parent=1 // pred_check
      _
    $region67: #{tpu_custom_call.1} parent=1 // pred_check_branch
      %2287 = sbr.rel (0) target = $region69
    $region68: #{tpu_custom_call.1} parent=1 // pred_region
      %s2289 = ssub.s32 32, 32
      %2290 = vsyncadd [#allocation4], %s2289
      %s2292 = sshll.u32 [#allocation13], 4
      %s2293 = int_to_ptr.vmem [resolvable:$true] %s2292
      %2295 = dma.vmem_to_hbm [thread:$0]  %s2293, 32, %s10, [#allocation4]
    $region69: #{tpu_custom_call.1} parent=1 // pred_fallthru
      _
    // Predicated region
    $region70: #{tpu_custom_call.1} parent=1 // pred_check
      _
    $region71: #{tpu_custom_call.1} parent=1 // pred_check_branch
      %2297 = sbr.rel (0) target = $region73
    $region72: #{tpu_custom_call.1} parent=1 // pred_region
      %2298 = dma.done [#allocation4], 32
    $region73: #{tpu_custom_call.1} parent=1 // pred_fallthru
      _
    %2299 = vsyncpa [#allocation3], 1
    %2300 = vsyncpa [#allocation6], 1
    %2301 = vsyncpa [#allocation9], 1
    %2302 = vsyncpa [#allocation12], 1
    %2303 = vsyncpa [#allocation4], 1

</llo_original>
